<compile_context>
chip_gen: v7x
topology: tpu7x:2x2x1
jax: 0.10.0
libtpu: 0.0.40
codegen_flags: <defaults>
</compile_context>

<pallas_src>
import functools

import jax
import jax.numpy as jnp
from jax.experimental import pallas as pl
from jax.experimental.pallas import tpu as pltpu


def _lstm_fc_kernel(x_ref, h0_ref, c0_ref, wih_ref, whh_ref, b_ref,
                    wfc_ref, bfc_ref,
                    out_ref, hn_ref, cn_ref,
                    gx_scr):
    """Whole-sequence LSTM + FC in one invocation.

    x_ref   : (T*B, I)   time-major inputs (rows t*B:(t+1)*B belong to timestep t)
    h0/c0   : (B, H)     initial states (f32)
    wih_ref : (I, 4H)    f32, gate-reordered [i,f,o,g], i/f/o columns pre-scaled by 0.5
    whh_ref : (H, 4H)    f32 or bf16, same reorder/scaling
    b_ref   : (1, 4H)    b_ih + b_hh, same reorder/scaling (f32)
    wfc_ref : (H, Opad)  f32, zero-padded to lane-dense width
    bfc_ref : (1, Opad)  f32
    gx_scr  : (T*B, 4H)  f32 VMEM scratch holding the hoisted input projection
    """
    B, H = h0_ref.shape
    TB, I = x_ref.shape
    T = TB // B
    H3 = 3 * H

    # ---- Prologue: input projection hoisted out of the recurrence (runs once) ----
    x2d = x_ref[...]                                  # (T*B, I)
    if I == 1:
        # Outer product on the VPU; a K=1 MXU matmul would be >99% zero padding.
        gates_x = x2d * wih_ref[...]                  # (T*B,1)*(1,4H) -> (T*B,4H)
    else:
        gates_x = jnp.dot(x2d, wih_ref[...], preferred_element_type=jnp.float32)
    gx_scr[...] = gates_x + b_ref[...]                # fused (b_ih + b_hh), done once

    rec_dtype = whh_ref.dtype

    def step(t, carry):
        h, c = carry                                  # (B, H) f32 each
        row = pl.multiple_of(t * B, B)
        gx_t = gx_scr[pl.ds(row, B), :]               # (B, 4H) precomputed x-part
        # Only this matmul sits on the serial critical path.  W_hh is read from VMEM
        # inside the loop (not pinned across the unrolled body in 32 vregs).
        gates = gx_t + jnp.dot(h.astype(rec_dtype), whh_ref[...],
                               preferred_element_type=jnp.float32)
        # Columns are pre-ordered [i, f, o, g]; i/f/o pre-activations arrive already
        # halved, so a single tanh over (B, 4H) yields every gate:
        #   sigmoid(z) = 0.5 * tanh(0.5 * z) + 0.5
        t_all = jnp.tanh(gates)                       # one EUP pass over 4H lanes
        ifo = 0.5 * t_all[:, :H3] + 0.5               # (B, 3H) sigmoids
        i_g = ifo[:, 0 * H:1 * H]
        f_g = ifo[:, 1 * H:2 * H]
        o_g = ifo[:, 2 * H:H3]
        g_g = t_all[:, H3:]                           # (B, H) tanh gate
        c_new = f_g * c + i_g * g_g
        h_new = o_g * jnp.tanh(c_new)
        return h_new, c_new

    h_fin, c_fin = jax.lax.fori_loop(
        0, T, step, (h0_ref[...], c0_ref[...]), unroll=min(T, 8))

    hn_ref[...] = h_fin
    cn_ref[...] = c_fin
    out_ref[...] = (jnp.dot(h_fin, wfc_ref[...],
                            preferred_element_type=jnp.float32)
                    + bfc_ref[...])


@functools.partial(jax.jit, static_argnames=("recurrent_dtype",))
def lstm_model_forward(x, h0, c0, params, recurrent_dtype=jnp.bfloat16):
    """Pallas forward pass matching LSTMModel.forward(x, (h0, c0)).

    x : (B, T, I) float32 (batch_first, like PyTorch)
    h0, c0 : (num_layers=1, B, H) float32
    recurrent_dtype : dtype used for the h @ W_hh^T MXU matmul (bf16 by default;
                      accumulation, state and nonlinearities stay f32).
    returns (logits (B, O), (h_n (1, B, H), c_n (1, B, H)))
    """
    B, T, I = x.shape
    H = params["w_hh"].shape[1]          # w_hh: (4H, H)
    O = params["w_fc"].shape[0]          # w_fc: (O, H)
    O_pad = ((O + 127) // 128) * 128     # lane-dense output width
    B_pad = ((B + 7) // 8) * 8           # sublane-aligned batch

    # ---- Gate reorder [i,f,g,o] -> [i,f,o,g] + 0.5 pre-scale of i/f/o rows ----
    # (exact power-of-two scale; enables the single-tanh gate evaluation in-kernel)
    perm = jnp.concatenate([jnp.arange(0, H), jnp.arange(H, 2 * H),
                            jnp.arange(3 * H, 4 * H), jnp.arange(2 * H, 3 * H)])
    scale = jnp.concatenate([jnp.full((3 * H,), 0.5, jnp.float32),
                             jnp.ones((H,), jnp.float32)])

    w_ih_r = params["w_ih"].astype(jnp.float32)[perm] * scale[:, None]   # (4H, I)
    w_hh_r = params["w_hh"].astype(jnp.float32)[perm] * scale[:, None]   # (4H, H)
    b_r = ((params["b_ih"] + params["b_hh"]).astype(jnp.float32)[perm] * scale)

    w_ih_t = w_ih_r.T                                     # (I, 4H) f32
    w_hh_t = w_hh_r.T.astype(recurrent_dtype)             # (H, 4H) recurrent dtype
    b = b_r.reshape(1, 4 * H)

    w_fc_pad = jnp.zeros((H, O_pad), jnp.float32).at[:, :O].set(
        params["w_fc"].T.astype(jnp.float32))
    b_fc_pad = jnp.zeros((1, O_pad), jnp.float32).at[:, :O].set(
        params["b_fc"].astype(jnp.float32).reshape(1, O))

    # ---- Batch padding so per-step gx_scr slices stay (8,128)-aligned ----
    xp, h0b, c0b = x, h0[0], c0[0]
    if B_pad != B:
        xp = jnp.zeros((B_pad, T, I), x.dtype).at[:B].set(x)
        h0b = jnp.zeros((B_pad, H), jnp.float32).at[:B].set(h0[0])
        c0b = jnp.zeros((B_pad, H), jnp.float32).at[:B].set(c0[0])

    x2d = jnp.transpose(xp, (1, 0, 2)).reshape(T * B_pad, I).astype(jnp.float32)

    # ---- Auditable VMEM budget (clamped at 64 MiB = v7x physical ceiling) ----
    f32 = 4
    rec_bytes = jnp.dtype(recurrent_dtype).itemsize
    vmem_bytes = (x2d.size * f32                              # x
                  + 2 * B_pad * H * f32                       # h0, c0
                  + I * 4 * H * f32 + 4 * H * f32             # w_ih, bias
                  + H * 4 * H * rec_bytes                     # w_hh
                  + (H + 1) * O_pad * f32                     # fc weight + bias
                  + B_pad * O_pad * f32 + 2 * B_pad * H * f32 # outputs
                  + T * B_pad * 4 * H * f32)                  # gx_scr
    vmem_limit = int(min(64 * 2**20, max(16 * 2**20, 2 * vmem_bytes + (1 << 20))))

    vmem_spec = pl.BlockSpec(memory_space=pltpu.MemorySpace.VMEM)

    out_pad, hn, cn = pl.pallas_call(
        _lstm_fc_kernel,
        out_shape=(
            jax.ShapeDtypeStruct((B_pad, O_pad), jnp.float32),
            jax.ShapeDtypeStruct((B_pad, H), jnp.float32),
            jax.ShapeDtypeStruct((B_pad, H), jnp.float32),
        ),
        in_specs=[vmem_spec] * 8,
        out_specs=(vmem_spec, vmem_spec, vmem_spec),
        scratch_shapes=[pltpu.VMEM((T * B_pad, 4 * H), jnp.float32)],
        compiler_params=pltpu.CompilerParams(vmem_limit_bytes=vmem_limit),
    )(x2d, h0b, c0b, w_ih_t, w_hh_t, b, w_fc_pad, b_fc_pad)

    return out_pad[:B, :O], (hn[:B][None, :, :], cn[:B][None, :, :])


def lstm_model_reference(x, h0, c0, params):
    """Pure-JAX reference matching nn.LSTM(batch_first=True) + nn.Linear."""
    w_ih, w_hh = params["w_ih"], params["w_hh"]
    b_ih, b_hh = params["b_ih"], params["b_hh"]
    w_fc, b_fc = params["w_fc"], params["b_fc"]
    H = w_hh.shape[1]

    def step(carry, x_t):
        h, c = carry
        gates = x_t @ w_ih.T + b_ih + h @ w_hh.T + b_hh
        i = jax.nn.sigmoid(gates[:, 0 * H:1 * H])
        f = jax.nn.sigmoid(gates[:, 1 * H:2 * H])
        g = jnp.tanh(gates[:, 2 * H:3 * H])
        o = jax.nn.sigmoid(gates[:, 3 * H:4 * H])
        c_new = f * c + i * g
        h_new = o * jnp.tanh(c_new)
        return (h_new, c_new), None

    (h_n, c_n), _ = jax.lax.scan(step, (h0[0], c0[0]),
                                 jnp.transpose(x, (1, 0, 2)))
    logits = h_n @ w_fc.T + b_fc
    return logits, (h_n[None], c_n[None])


def init_params(key, input_size, hidden_size, output_size):
    """Deterministic init mirroring PyTorch's U(-1/sqrt(H), 1/sqrt(H)) default."""
    ks = jax.random.split(key, 6)
    s = 1.0 / jnp.sqrt(jnp.float32(hidden_size))
    u = lambda k, shape: jax.random.uniform(k, shape, jnp.float32, -s, s)
    return {
        "w_ih": u(ks[0], (4 * hidden_size, input_size)),
        "w_hh": u(ks[1], (4 * hidden_size, hidden_size)),
        "b_ih": u(ks[2], (4 * hidden_size,)),
        "b_hh": u(ks[3], (4 * hidden_size,)),
        "w_fc": u(ks[4], (output_size, hidden_size)),
        "b_fc": u(ks[5], (output_size,)),
    }


if __name__ == "__main__":
    input_size = 1
    hidden_size = 128
    output_size = 4
    num_layers = 1

    batch = 8
    seq = 8

    key = jax.random.PRNGKey(0)
    k_param, k_x = jax.random.split(key)

    params = init_params(k_param, input_size, hidden_size, output_size)
    x = jax.random.normal(k_x, (batch, seq, input_size), jnp.float32)
    # init_hidden(batch_size): zeros of shape (num_layers, B, H)
    h0 = jnp.zeros((num_layers, batch, hidden_size), jnp.float32)
    c0 = jnp.zeros((num_layers, batch, hidden_size), jnp.float32)

    ref_logits, (ref_hn, ref_cn) = lstm_model_reference(x, h0, c0, params)

    # Exact-dtype path (f32 recurrent matmul): tight check against the reference.
    logits32, (hn32, cn32) = lstm_model_forward(
        x, h0, c0, params, recurrent_dtype=jnp.float32)
    jax.block_until_ready((logits32, hn32, cn32))
    assert logits32.shape == (batch, output_size)
    assert hn32.shape == (num_layers, batch, hidden_size)
    assert cn32.shape == (num_layers, batch, hidden_size)
    assert jnp.allclose(logits32, ref_logits, atol=2e-4, rtol=2e-4)
    assert jnp.allclose(hn32, ref_hn, atol=2e-4, rtol=2e-4)
    assert jnp.allclose(cn32, ref_cn, atol=2e-4, rtol=2e-4)

    # Default fast path: bf16 inputs to the recurrent MXU matmul (f32 accumulation and
    # f32 state/nonlinearities) -> looser tolerance.
    logits_bf, (hn_bf, cn_bf) = lstm_model_forward(x, h0, c0, params)
    jax.block_until_ready((logits_bf, hn_bf, cn_bf))
    assert logits_bf.shape == (batch, output_size)
    assert jnp.allclose(logits_bf, ref_logits, atol=5e-2, rtol=5e-2)
    assert jnp.allclose(hn_bf, ref_hn, atol=5e-2, rtol=5e-2)
    assert jnp.allclose(cn_bf, ref_cn, atol=5e-2, rtol=5e-2)

    print("KERNEL_OK")
</pallas_src>

<mosaic_0001>
module attributes {stable_mosaic.version = 11 : i64} {
  func.func @_lstm_fc_kernel(%arg0: memref<64x1xf32, #tpu.memory_space<vmem>>, %arg1: memref<8x128xf32, #tpu.memory_space<vmem>>, %arg2: memref<8x128xf32, #tpu.memory_space<vmem>>, %arg3: memref<1x512xf32, #tpu.memory_space<vmem>>, %arg4: memref<128x512xf32, #tpu.memory_space<vmem>>, %arg5: memref<1x512xf32, #tpu.memory_space<vmem>>, %arg6: memref<128x128xf32, #tpu.memory_space<vmem>>, %arg7: memref<1x128xf32, #tpu.memory_space<vmem>>, %arg8: memref<8x128xf32, #tpu.memory_space<vmem>>, %arg9: memref<8x128xf32, #tpu.memory_space<vmem>>, %arg10: memref<8x128xf32, #tpu.memory_space<vmem>>, %arg11: memref<64x512xf32, #tpu.memory_space<vmem>>) attributes {dimension_semantics = [], scalar_prefetch = 0 : i64, scratch_operands = 1 : i64, tpu.core_type = #tpu.core_type<tc>} {
    %c0 = arith.constant 0 : index
    %c0_0 = arith.constant 0 : index
    %0 = vector.load %arg0[%c0, %c0_0] : memref<64x1xf32, #tpu.memory_space<vmem>>, vector<64x1xf32>
    %c0_1 = arith.constant 0 : index
    %c0_2 = arith.constant 0 : index
    %1 = vector.load %arg3[%c0_1, %c0_2] : memref<1x512xf32, #tpu.memory_space<vmem>>, vector<1x512xf32>
    %2 = vector.broadcast %0 : vector<64x1xf32> to vector<64x512xf32>
    %3 = vector.broadcast %1 : vector<1x512xf32> to vector<64x512xf32>
    %4 = arith.mulf %2, %3 : vector<64x512xf32>
    %c0_3 = arith.constant 0 : index
    %c0_4 = arith.constant 0 : index
    %5 = vector.load %arg5[%c0_3, %c0_4] : memref<1x512xf32, #tpu.memory_space<vmem>>, vector<1x512xf32>
    %6 = vector.broadcast %5 : vector<1x512xf32> to vector<64x512xf32>
    %7 = arith.addf %4, %6 : vector<64x512xf32>
    %c0_5 = arith.constant 0 : index
    %c0_6 = arith.constant 0 : index
    %8 = vector.load %arg11[%c0_5, %c0_6] : memref<64x512xf32, #tpu.memory_space<vmem>>, vector<64x512xf32>
    tpu.vector_store %arg11[%c0_5, %c0_6], %7 {strides = array<i32>} : memref<64x512xf32, #tpu.memory_space<vmem>>, vector<64x512xf32>,
    %c0_7 = arith.constant 0 : index
    %c0_8 = arith.constant 0 : index
    %9 = vector.load %arg1[%c0_7, %c0_8] : memref<8x128xf32, #tpu.memory_space<vmem>>, vector<8x128xf32>
    %c0_9 = arith.constant 0 : index
    %c0_10 = arith.constant 0 : index
    %10 = vector.load %arg2[%c0_9, %c0_10] : memref<8x128xf32, #tpu.memory_space<vmem>>, vector<8x128xf32>
    %c0_i32 = arith.constant 0 : i32
    %c8_i32 = arith.constant 8 : i32
    %11 = arith.muli %c0_i32, %c8_i32 : i32
    %12 = tpu.assume_multiple %11, 8 : i32
    %13 = arith.index_cast %12 : i32 to index
    %c0_11 = arith.constant 0 : index
    %14 = vector.load %arg11[%13, %c0_11] : memref<64x512xf32, #tpu.memory_space<vmem>>, vector<8x512xf32>
    %c0_12 = arith.constant 0 : index
    %c0_13 = arith.constant 0 : index
    %15 = vector.load %arg4[%c0_12, %c0_13] : memref<128x512xf32, #tpu.memory_space<vmem>>, vector<128x512xf32>
    %cst = arith.constant dense<0.000000e+00> : vector<8x512xf32>
    %16 = tpu.matmul %9, %15, %cst {dimension_numbers = #tpu.dot_dimension_numbers<[1], [0], [0], [1], [0, 0, 1, 1], [], []>} : vector<8x128xf32>, vector<128x512xf32>, vector<8x512xf32> -> vector<8x512xf32>
    %17 = arith.addf %14, %16 : vector<8x512xf32>
    %18 = math.tanh %17 : vector<8x512xf32>
    %19 = vector.extract_strided_slice %18 {offsets = [0, 0], sizes = [8, 384], strides = [1, 1]} : vector<8x512xf32> to vector<8x384xf32>
    %cst_14 = arith.constant 5.000000e-01 : f32
    %20 = vector.broadcast %cst_14 : f32 to vector<8x384xf32>
    %21 = arith.mulf %20, %19 : vector<8x384xf32>
    %cst_15 = arith.constant 5.000000e-01 : f32
    %22 = vector.broadcast %cst_15 : f32 to vector<8x384xf32>
    %23 = arith.addf %21, %22 : vector<8x384xf32>
    %24 = vector.extract_strided_slice %23 {offsets = [0, 0], sizes = [8, 128], strides = [1, 1]} : vector<8x384xf32> to vector<8x128xf32>
    %25 = vector.extract_strided_slice %23 {offsets = [0, 128], sizes = [8, 128], strides = [1, 1]} : vector<8x384xf32> to vector<8x128xf32>
    %26 = vector.extract_strided_slice %23 {offsets = [0, 256], sizes = [8, 128], strides = [1, 1]} : vector<8x384xf32> to vector<8x128xf32>
    %27 = vector.extract_strided_slice %18 {offsets = [0, 384], sizes = [8, 128], strides = [1, 1]} : vector<8x512xf32> to vector<8x128xf32>
    %28 = arith.mulf %25, %10 : vector<8x128xf32>
    %29 = arith.mulf %24, %27 : vector<8x128xf32>
    %30 = arith.addf %28, %29 : vector<8x128xf32>
    %31 = math.tanh %30 : vector<8x128xf32>
    %32 = arith.mulf %26, %31 : vector<8x128xf32>
    %c1_i32 = arith.constant 1 : i32
    %c8_i32_16 = arith.constant 8 : i32
    %33 = arith.muli %c1_i32, %c8_i32_16 : i32
    %34 = tpu.assume_multiple %33, 8 : i32
    %35 = arith.index_cast %34 : i32 to index
    %c0_17 = arith.constant 0 : index
    %36 = vector.load %arg11[%35, %c0_17] : memref<64x512xf32, #tpu.memory_space<vmem>>, vector<8x512xf32>
    %c0_18 = arith.constant 0 : index
    %c0_19 = arith.constant 0 : index
    %37 = vector.load %arg4[%c0_18, %c0_19] : memref<128x512xf32, #tpu.memory_space<vmem>>, vector<128x512xf32>
    %cst_20 = arith.constant dense<0.000000e+00> : vector<8x512xf32>
    %38 = tpu.matmul %32, %37, %cst_20 {dimension_numbers = #tpu.dot_dimension_numbers<[1], [0], [0], [1], [0, 0, 1, 1], [], []>} : vector<8x128xf32>, vector<128x512xf32>, vector<8x512xf32> -> vector<8x512xf32>
    %39 = arith.addf %36, %38 : vector<8x512xf32>
    %40 = math.tanh %39 : vector<8x512xf32>
    %41 = vector.extract_strided_slice %40 {offsets = [0, 0], sizes = [8, 384], strides = [1, 1]} : vector<8x512xf32> to vector<8x384xf32>
    %cst_21 = arith.constant 5.000000e-01 : f32
    %42 = vector.broadcast %cst_21 : f32 to vector<8x384xf32>
    %43 = arith.mulf %42, %41 : vector<8x384xf32>
    %cst_22 = arith.constant 5.000000e-01 : f32
    %44 = vector.broadcast %cst_22 : f32 to vector<8x384xf32>
    %45 = arith.addf %43, %44 : vector<8x384xf32>
    %46 = vector.extract_strided_slice %45 {offsets = [0, 0], sizes = [8, 128], strides = [1, 1]} : vector<8x384xf32> to vector<8x128xf32>
    %47 = vector.extract_strided_slice %45 {offsets = [0, 128], sizes = [8, 128], strides = [1, 1]} : vector<8x384xf32> to vector<8x128xf32>
    %48 = vector.extract_strided_slice %45 {offsets = [0, 256], sizes = [8, 128], strides = [1, 1]} : vector<8x384xf32> to vector<8x128xf32>
    %49 = vector.extract_strided_slice %40 {offsets = [0, 384], sizes = [8, 128], strides = [1, 1]} : vector<8x512xf32> to vector<8x128xf32>
    %50 = arith.mulf %47, %30 : vector<8x128xf32>
    %51 = arith.mulf %46, %49 : vector<8x128xf32>
    %52 = arith.addf %50, %51 : vector<8x128xf32>
    %53 = math.tanh %52 : vector<8x128xf32>
    %54 = arith.mulf %48, %53 : vector<8x128xf32>
    %c2_i32 = arith.constant 2 : i32
    %c8_i32_23 = arith.constant 8 : i32
    %55 = arith.muli %c2_i32, %c8_i32_23 : i32
    %56 = tpu.assume_multiple %55, 8 : i32
    %57 = arith.index_cast %56 : i32 to index
    %c0_24 = arith.constant 0 : index
    %58 = vector.load %arg11[%57, %c0_24] : memref<64x512xf32, #tpu.memory_space<vmem>>, vector<8x512xf32>
    %c0_25 = arith.constant 0 : index
    %c0_26 = arith.constant 0 : index
    %59 = vector.load %arg4[%c0_25, %c0_26] : memref<128x512xf32, #tpu.memory_space<vmem>>, vector<128x512xf32>
    %cst_27 = arith.constant dense<0.000000e+00> : vector<8x512xf32>
    %60 = tpu.matmul %54, %59, %cst_27 {dimension_numbers = #tpu.dot_dimension_numbers<[1], [0], [0], [1], [0, 0, 1, 1], [], []>} : vector<8x128xf32>, vector<128x512xf32>, vector<8x512xf32> -> vector<8x512xf32>
    %61 = arith.addf %58, %60 : vector<8x512xf32>
    %62 = math.tanh %61 : vector<8x512xf32>
    %63 = vector.extract_strided_slice %62 {offsets = [0, 0], sizes = [8, 384], strides = [1, 1]} : vector<8x512xf32> to vector<8x384xf32>
    %cst_28 = arith.constant 5.000000e-01 : f32
    %64 = vector.broadcast %cst_28 : f32 to vector<8x384xf32>
    %65 = arith.mulf %64, %63 : vector<8x384xf32>
    %cst_29 = arith.constant 5.000000e-01 : f32
    %66 = vector.broadcast %cst_29 : f32 to vector<8x384xf32>
    %67 = arith.addf %65, %66 : vector<8x384xf32>
    %68 = vector.extract_strided_slice %67 {offsets = [0, 0], sizes = [8, 128], strides = [1, 1]} : vector<8x384xf32> to vector<8x128xf32>
    %69 = vector.extract_strided_slice %67 {offsets = [0, 128], sizes = [8, 128], strides = [1, 1]} : vector<8x384xf32> to vector<8x128xf32>
    %70 = vector.extract_strided_slice %67 {offsets = [0, 256], sizes = [8, 128], strides = [1, 1]} : vector<8x384xf32> to vector<8x128xf32>
    %71 = vector.extract_strided_slice %62 {offsets = [0, 384], sizes = [8, 128], strides = [1, 1]} : vector<8x512xf32> to vector<8x128xf32>
    %72 = arith.mulf %69, %52 : vector<8x128xf32>
    %73 = arith.mulf %68, %71 : vector<8x128xf32>
    %74 = arith.addf %72, %73 : vector<8x128xf32>
    %75 = math.tanh %74 : vector<8x128xf32>
    %76 = arith.mulf %70, %75 : vector<8x128xf32>
    %c3_i32 = arith.constant 3 : i32
    %c8_i32_30 = arith.constant 8 : i32
    %77 = arith.muli %c3_i32, %c8_i32_30 : i32
    %78 = tpu.assume_multiple %77, 8 : i32
    %79 = arith.index_cast %78 : i32 to index
    %c0_31 = arith.constant 0 : index
    %80 = vector.load %arg11[%79, %c0_31] : memref<64x512xf32, #tpu.memory_space<vmem>>, vector<8x512xf32>
    %c0_32 = arith.constant 0 : index
    %c0_33 = arith.constant 0 : index
    %81 = vector.load %arg4[%c0_32, %c0_33] : memref<128x512xf32, #tpu.memory_space<vmem>>, vector<128x512xf32>
    %cst_34 = arith.constant dense<0.000000e+00> : vector<8x512xf32>
    %82 = tpu.matmul %76, %81, %cst_34 {dimension_numbers = #tpu.dot_dimension_numbers<[1], [0], [0], [1], [0, 0, 1, 1], [], []>} : vector<8x128xf32>, vector<128x512xf32>, vector<8x512xf32> -> vector<8x512xf32>
    %83 = arith.addf %80, %82 : vector<8x512xf32>
    %84 = math.tanh %83 : vector<8x512xf32>
    %85 = vector.extract_strided_slice %84 {offsets = [0, 0], sizes = [8, 384], strides = [1, 1]} : vector<8x512xf32> to vector<8x384xf32>
    %cst_35 = arith.constant 5.000000e-01 : f32
    %86 = vector.broadcast %cst_35 : f32 to vector<8x384xf32>
    %87 = arith.mulf %86, %85 : vector<8x384xf32>
    %cst_36 = arith.constant 5.000000e-01 : f32
    %88 = vector.broadcast %cst_36 : f32 to vector<8x384xf32>
    %89 = arith.addf %87, %88 : vector<8x384xf32>
    %90 = vector.extract_strided_slice %89 {offsets = [0, 0], sizes = [8, 128], strides = [1, 1]} : vector<8x384xf32> to vector<8x128xf32>
    %91 = vector.extract_strided_slice %89 {offsets = [0, 128], sizes = [8, 128], strides = [1, 1]} : vector<8x384xf32> to vector<8x128xf32>
    %92 = vector.extract_strided_slice %89 {offsets = [0, 256], sizes = [8, 128], strides = [1, 1]} : vector<8x384xf32> to vector<8x128xf32>
    %93 = vector.extract_strided_slice %84 {offsets = [0, 384], sizes = [8, 128], strides = [1, 1]} : vector<8x512xf32> to vector<8x128xf32>
    %94 = arith.mulf %91, %74 : vector<8x128xf32>
    %95 = arith.mulf %90, %93 : vector<8x128xf32>
    %96 = arith.addf %94, %95 : vector<8x128xf32>
    %97 = math.tanh %96 : vector<8x128xf32>
    %98 = arith.mulf %92, %97 : vector<8x128xf32>
    %c4_i32 = arith.constant 4 : i32
    %c8_i32_37 = arith.constant 8 : i32
    %99 = arith.muli %c4_i32, %c8_i32_37 : i32
    %100 = tpu.assume_multiple %99, 8 : i32
    %101 = arith.index_cast %100 : i32 to index
    %c0_38 = arith.constant 0 : index
    %102 = vector.load %arg11[%101, %c0_38] : memref<64x512xf32, #tpu.memory_space<vmem>>, vector<8x512xf32>
    %c0_39 = arith.constant 0 : index
    %c0_40 = arith.constant 0 : index
    %103 = vector.load %arg4[%c0_39, %c0_40] : memref<128x512xf32, #tpu.memory_space<vmem>>, vector<128x512xf32>
    %cst_41 = arith.constant dense<0.000000e+00> : vector<8x512xf32>
    %104 = tpu.matmul %98, %103, %cst_41 {dimension_numbers = #tpu.dot_dimension_numbers<[1], [0], [0], [1], [0, 0, 1, 1], [], []>} : vector<8x128xf32>, vector<128x512xf32>, vector<8x512xf32> -> vector<8x512xf32>
    %105 = arith.addf %102, %104 : vector<8x512xf32>
    %106 = math.tanh %105 : vector<8x512xf32>
    %107 = vector.extract_strided_slice %106 {offsets = [0, 0], sizes = [8, 384], strides = [1, 1]} : vector<8x512xf32> to vector<8x384xf32>
    %cst_42 = arith.constant 5.000000e-01 : f32
    %108 = vector.broadcast %cst_42 : f32 to vector<8x384xf32>
    %109 = arith.mulf %108, %107 : vector<8x384xf32>
    %cst_43 = arith.constant 5.000000e-01 : f32
    %110 = vector.broadcast %cst_43 : f32 to vector<8x384xf32>
    %111 = arith.addf %109, %110 : vector<8x384xf32>
    %112 = vector.extract_strided_slice %111 {offsets = [0, 0], sizes = [8, 128], strides = [1, 1]} : vector<8x384xf32> to vector<8x128xf32>
    %113 = vector.extract_strided_slice %111 {offsets = [0, 128], sizes = [8, 128], strides = [1, 1]} : vector<8x384xf32> to vector<8x128xf32>
    %114 = vector.extract_strided_slice %111 {offsets = [0, 256], sizes = [8, 128], strides = [1, 1]} : vector<8x384xf32> to vector<8x128xf32>
    %115 = vector.extract_strided_slice %106 {offsets = [0, 384], sizes = [8, 128], strides = [1, 1]} : vector<8x512xf32> to vector<8x128xf32>
    %116 = arith.mulf %113, %96 : vector<8x128xf32>
    %117 = arith.mulf %112, %115 : vector<8x128xf32>
    %118 = arith.addf %116, %117 : vector<8x128xf32>
    %119 = math.tanh %118 : vector<8x128xf32>
    %120 = arith.mulf %114, %119 : vector<8x128xf32>
    %c5_i32 = arith.constant 5 : i32
    %c8_i32_44 = arith.constant 8 : i32
    %121 = arith.muli %c5_i32, %c8_i32_44 : i32
    %122 = tpu.assume_multiple %121, 8 : i32
    %123 = arith.index_cast %122 : i32 to index
    %c0_45 = arith.constant 0 : index
    %124 = vector.load %arg11[%123, %c0_45] : memref<64x512xf32, #tpu.memory_space<vmem>>, vector<8x512xf32>
    %c0_46 = arith.constant 0 : index
    %c0_47 = arith.constant 0 : index
    %125 = vector.load %arg4[%c0_46, %c0_47] : memref<128x512xf32, #tpu.memory_space<vmem>>, vector<128x512xf32>
    %cst_48 = arith.constant dense<0.000000e+00> : vector<8x512xf32>
    %126 = tpu.matmul %120, %125, %cst_48 {dimension_numbers = #tpu.dot_dimension_numbers<[1], [0], [0], [1], [0, 0, 1, 1], [], []>} : vector<8x128xf32>, vector<128x512xf32>, vector<8x512xf32> -> vector<8x512xf32>
    %127 = arith.addf %124, %126 : vector<8x512xf32>
    %128 = math.tanh %127 : vector<8x512xf32>
    %129 = vector.extract_strided_slice %128 {offsets = [0, 0], sizes = [8, 384], strides = [1, 1]} : vector<8x512xf32> to vector<8x384xf32>
    %cst_49 = arith.constant 5.000000e-01 : f32
    %130 = vector.broadcast %cst_49 : f32 to vector<8x384xf32>
    %131 = arith.mulf %130, %129 : vector<8x384xf32>
    %cst_50 = arith.constant 5.000000e-01 : f32
    %132 = vector.broadcast %cst_50 : f32 to vector<8x384xf32>
    %133 = arith.addf %131, %132 : vector<8x384xf32>
    %134 = vector.extract_strided_slice %133 {offsets = [0, 0], sizes = [8, 128], strides = [1, 1]} : vector<8x384xf32> to vector<8x128xf32>
    %135 = vector.extract_strided_slice %133 {offsets = [0, 128], sizes = [8, 128], strides = [1, 1]} : vector<8x384xf32> to vector<8x128xf32>
    %136 = vector.extract_strided_slice %133 {offsets = [0, 256], sizes = [8, 128], strides = [1, 1]} : vector<8x384xf32> to vector<8x128xf32>
    %137 = vector.extract_strided_slice %128 {offsets = [0, 384], sizes = [8, 128], strides = [1, 1]} : vector<8x512xf32> to vector<8x128xf32>
    %138 = arith.mulf %135, %118 : vector<8x128xf32>
    %139 = arith.mulf %134, %137 : vector<8x128xf32>
    %140 = arith.addf %138, %139 : vector<8x128xf32>
    %141 = math.tanh %140 : vector<8x128xf32>
    %142 = arith.mulf %136, %141 : vector<8x128xf32>
    %c6_i32 = arith.constant 6 : i32
    %c8_i32_51 = arith.constant 8 : i32
    %143 = arith.muli %c6_i32, %c8_i32_51 : i32
    %144 = tpu.assume_multiple %143, 8 : i32
    %145 = arith.index_cast %144 : i32 to index
    %c0_52 = arith.constant 0 : index
    %146 = vector.load %arg11[%145, %c0_52] : memref<64x512xf32, #tpu.memory_space<vmem>>, vector<8x512xf32>
    %c0_53 = arith.constant 0 : index
    %c0_54 = arith.constant 0 : index
    %147 = vector.load %arg4[%c0_53, %c0_54] : memref<128x512xf32, #tpu.memory_space<vmem>>, vector<128x512xf32>
    %cst_55 = arith.constant dense<0.000000e+00> : vector<8x512xf32>
    %148 = tpu.matmul %142, %147, %cst_55 {dimension_numbers = #tpu.dot_dimension_numbers<[1], [0], [0], [1], [0, 0, 1, 1], [], []>} : vector<8x128xf32>, vector<128x512xf32>, vector<8x512xf32> -> vector<8x512xf32>
    %149 = arith.addf %146, %148 : vector<8x512xf32>
    %150 = math.tanh %149 : vector<8x512xf32>
    %151 = vector.extract_strided_slice %150 {offsets = [0, 0], sizes = [8, 384], strides = [1, 1]} : vector<8x512xf32> to vector<8x384xf32>
    %cst_56 = arith.constant 5.000000e-01 : f32
    %152 = vector.broadcast %cst_56 : f32 to vector<8x384xf32>
    %153 = arith.mulf %152, %151 : vector<8x384xf32>
    %cst_57 = arith.constant 5.000000e-01 : f32
    %154 = vector.broadcast %cst_57 : f32 to vector<8x384xf32>
    %155 = arith.addf %153, %154 : vector<8x384xf32>
    %156 = vector.extract_strided_slice %155 {offsets = [0, 0], sizes = [8, 128], strides = [1, 1]} : vector<8x384xf32> to vector<8x128xf32>
    %157 = vector.extract_strided_slice %155 {offsets = [0, 128], sizes = [8, 128], strides = [1, 1]} : vector<8x384xf32> to vector<8x128xf32>
    %158 = vector.extract_strided_slice %155 {offsets = [0, 256], sizes = [8, 128], strides = [1, 1]} : vector<8x384xf32> to vector<8x128xf32>
    %159 = vector.extract_strided_slice %150 {offsets = [0, 384], sizes = [8, 128], strides = [1, 1]} : vector<8x512xf32> to vector<8x128xf32>
    %160 = arith.mulf %157, %140 : vector<8x128xf32>
    %161 = arith.mulf %156, %159 : vector<8x128xf32>
    %162 = arith.addf %160, %161 : vector<8x128xf32>
    %163 = math.tanh %162 : vector<8x128xf32>
    %164 = arith.mulf %158, %163 : vector<8x128xf32>
    %c7_i32 = arith.constant 7 : i32
    %c8_i32_58 = arith.constant 8 : i32
    %165 = arith.muli %c7_i32, %c8_i32_58 : i32
    %166 = tpu.assume_multiple %165, 8 : i32
    %167 = arith.index_cast %166 : i32 to index
    %c0_59 = arith.constant 0 : index
    %168 = vector.load %arg11[%167, %c0_59] : memref<64x512xf32, #tpu.memory_space<vmem>>, vector<8x512xf32>
    %c0_60 = arith.constant 0 : index
    %c0_61 = arith.constant 0 : index
    %169 = vector.load %arg4[%c0_60, %c0_61] : memref<128x512xf32, #tpu.memory_space<vmem>>, vector<128x512xf32>
    %cst_62 = arith.constant dense<0.000000e+00> : vector<8x512xf32>
    %170 = tpu.matmul %164, %169, %cst_62 {dimension_numbers = #tpu.dot_dimension_numbers<[1], [0], [0], [1], [0, 0, 1, 1], [], []>} : vector<8x128xf32>, vector<128x512xf32>, vector<8x512xf32> -> vector<8x512xf32>
    %171 = arith.addf %168, %170 : vector<8x512xf32>
    %172 = math.tanh %171 : vector<8x512xf32>
    %173 = vector.extract_strided_slice %172 {offsets = [0, 0], sizes = [8, 384], strides = [1, 1]} : vector<8x512xf32> to vector<8x384xf32>
    %cst_63 = arith.constant 5.000000e-01 : f32
    %174 = vector.broadcast %cst_63 : f32 to vector<8x384xf32>
    %175 = arith.mulf %174, %173 : vector<8x384xf32>
    %cst_64 = arith.constant 5.000000e-01 : f32
    %176 = vector.broadcast %cst_64 : f32 to vector<8x384xf32>
    %177 = arith.addf %175, %176 : vector<8x384xf32>
    %178 = vector.extract_strided_slice %177 {offsets = [0, 0], sizes = [8, 128], strides = [1, 1]} : vector<8x384xf32> to vector<8x128xf32>
    %179 = vector.extract_strided_slice %177 {offsets = [0, 128], sizes = [8, 128], strides = [1, 1]} : vector<8x384xf32> to vector<8x128xf32>
    %180 = vector.extract_strided_slice %177 {offsets = [0, 256], sizes = [8, 128], strides = [1, 1]} : vector<8x384xf32> to vector<8x128xf32>
    %181 = vector.extract_strided_slice %172 {offsets = [0, 384], sizes = [8, 128], strides = [1, 1]} : vector<8x512xf32> to vector<8x128xf32>
    %182 = arith.mulf %179, %162 : vector<8x128xf32>
    %183 = arith.mulf %178, %181 : vector<8x128xf32>
    %184 = arith.addf %182, %183 : vector<8x128xf32>
    %185 = math.tanh %184 : vector<8x128xf32>
    %186 = arith.mulf %180, %185 : vector<8x128xf32>
    %c8_i32_65 = arith.constant 8 : i32
    %c0_66 = arith.constant 0 : index
    %c0_67 = arith.constant 0 : index
    %187 = vector.load %arg9[%c0_66, %c0_67] : memref<8x128xf32, #tpu.memory_space<vmem>>, vector<8x128xf32>
    tpu.vector_store %arg9[%c0_66, %c0_67], %186 {strides = array<i32>} : memref<8x128xf32, #tpu.memory_space<vmem>>, vector<8x128xf32>,
    %c0_68 = arith.constant 0 : index
    %c0_69 = arith.constant 0 : index
    %188 = vector.load %arg10[%c0_68, %c0_69] : memref<8x128xf32, #tpu.memory_space<vmem>>, vector<8x128xf32>
    tpu.vector_store %arg10[%c0_68, %c0_69], %184 {strides = array<i32>} : memref<8x128xf32, #tpu.memory_space<vmem>>, vector<8x128xf32>,
    %c0_70 = arith.constant 0 : index
    %c0_71 = arith.constant 0 : index
    %189 = vector.load %arg6[%c0_70, %c0_71] : memref<128x128xf32, #tpu.memory_space<vmem>>, vector<128x128xf32>
    %cst_72 = arith.constant dense<0.000000e+00> : vector<8x128xf32>
    %190 = tpu.matmul %186, %189, %cst_72 {dimension_numbers = #tpu.dot_dimension_numbers<[1], [0], [0], [1], [0, 0, 1, 1], [], []>} : vector<8x128xf32>, vector<128x128xf32>, vector<8x128xf32> -> vector<8x128xf32>
    %c0_73 = arith.constant 0 : index
    %c0_74 = arith.constant 0 : index
    %191 = vector.load %arg7[%c0_73, %c0_74] : memref<1x128xf32, #tpu.memory_space<vmem>>, vector<1x128xf32>
    %192 = vector.broadcast %191 : vector<1x128xf32> to vector<8x128xf32>
    %193 = arith.addf %190, %192 : vector<8x128xf32>
    %c0_75 = arith.constant 0 : index
    %c0_76 = arith.constant 0 : index
    %194 = vector.load %arg8[%c0_75, %c0_76] : memref<8x128xf32, #tpu.memory_space<vmem>>, vector<8x128xf32>
    tpu.vector_store %arg8[%c0_75, %c0_76], %193 {strides = array<i32>} : memref<8x128xf32, #tpu.memory_space<vmem>>, vector<8x128xf32>,
    return
  }
}

</mosaic_0001>

<llo_original>
// kernel: lstm_model_forward.1
$region0: #{lstm_model_forward.1}
  #allocation0 [shape = 'u32[]', space=smem, size = 0x4, offset = 0x4, fixed_abs, tag = 'smem constant byte address 0x4 - core index']
  #allocation1 [shape = 'u32[144,128]{1,0:T(1,128)}', space=vmem, size = 0x12000, scoped, tag = 'internal scratch']
  #allocation2 [shape = 'f32[64,512]{1,0:T(8,128)}', space=vmem, size = 0x20000, scoped, tag = 'scratch operand']
  %s0 = inlined_call_operand.vmem [shape: f32[64,1], index: 0, kind: input, shape index: {}]
  %s1 = inlined_call_operand.vmem [shape: f32[8,128], index: 1, kind: input, shape index: {}]
  %s2 = inlined_call_operand.vmem [shape: f32[8,128], index: 2, kind: input, shape index: {}]
  %s3 = inlined_call_operand.vmem [shape: f32[1,512], index: 3, kind: input, shape index: {}]
  %s4 = inlined_call_operand.vmem [shape: f32[128,512], index: 4, kind: input, shape index: {}]
  %s5 = inlined_call_operand.vmem [shape: f32[1,512], index: 5, kind: input, shape index: {}]
  %s6 = inlined_call_operand.vmem [shape: f32[128,128], index: 6, kind: input, shape index: {}]
  %s7 = inlined_call_operand.vmem [shape: f32[1,128], index: 7, kind: input, shape index: {}]
  %s8 = inlined_call_operand.vmem [shape: f32[8,128], index: 8, kind: output, shape index: {0}]
  %s9 = inlined_call_operand.hbm [shape: f32[8,128], index: 9, kind: output, shape index: {1}]
  %s10 = inlined_call_operand.hbm [shape: f32[8,128], index: 10, kind: output, shape index: {2}]
  %11 = xla_tuple %s8, %s9, %s10
  %s12 = sld [smem:[#allocation0]]
  $region58: #{lstm_model_forward.1} parent=0
    _
  %s14 = ssub.s32 1, %s12
  %s15 = scalar_select 0, %s14, %s12
  $region1: #{lstm_model_forward.1} parent=0
    #allocation3 [shape = 'u8[4096]{0}', space=vmem, size = 0x1000, scoped, tag = 'output window, operand 1, single buffered']
    #allocation4 [shape = 's32[1]{0}', space=sflag, size = 0x4, scoped, tag = 'scoped memory for lstm_model_forward.1']
    #allocation5 [shape = 'u8[4096]{0}', space=vmem, size = 0x1000, scoped, tag = 'output window, operand 2, single buffered']
    #allocation6 [shape = 's32[1]{0}', space=sflag, size = 0x4, scoped, tag = 'scoped memory for lstm_model_forward.1']
    %16 = vsyncpa [#allocation4], 0
    %17 = vsyncpa [#allocation6], 0
    // Predicated region
    $region2: #{lstm_model_forward.1} parent=1 // pred_check
      _
    $region3: #{lstm_model_forward.1} parent=1 // pred_check_branch
      %19 = sbr.rel (0) target = $region5
    $region4: #{lstm_model_forward.1} parent=1 // pred_region
      _
    $region5: #{lstm_model_forward.1} parent=1 // pred_fallthru
      _
    // Predicated region
    $region6: #{lstm_model_forward.1} parent=1 // pred_check
      _
    $region7: #{lstm_model_forward.1} parent=1 // pred_check_branch
      %21 = sbr.rel (0) target = $region9
    $region8: #{lstm_model_forward.1} parent=1 // pred_region
      _
    $region9: #{lstm_model_forward.1} parent=1 // pred_fallthru
      _
    // Predicated region
    $region10: #{lstm_model_forward.1} parent=1 // pred_check
      _
    $region11: #{lstm_model_forward.1} parent=1 // pred_check_branch
      %23 = sbr.rel (0) target = $region13
    $region12: #{lstm_model_forward.1} parent=1 // pred_region
      _
    $region13: #{lstm_model_forward.1} parent=1 // pred_fallthru
      _
    // Predicated region
    $region14: #{lstm_model_forward.1} parent=1 // pred_check
      _
    $region15: #{lstm_model_forward.1} parent=1 // pred_check_branch
      %25 = sbr.rel (0) target = $region17
    $region16: #{lstm_model_forward.1} parent=1 // pred_region
      _
    $region17: #{lstm_model_forward.1} parent=1 // pred_fallthru
      _
    // Predicated region
    $region18: #{lstm_model_forward.1} parent=1 // pred_check
      _
    $region19: #{lstm_model_forward.1} parent=1 // pred_check_branch
      %27 = sbr.rel (0) target = $region21
    $region20: #{lstm_model_forward.1} parent=1 // pred_region
      _
    $region21: #{lstm_model_forward.1} parent=1 // pred_fallthru
      _
    // Predicated region
    $region22: #{lstm_model_forward.1} parent=1 // pred_check
      _
    $region23: #{lstm_model_forward.1} parent=1 // pred_check_branch
      %29 = sbr.rel (0) target = $region25
    $region24: #{lstm_model_forward.1} parent=1 // pred_region
      _
    $region25: #{lstm_model_forward.1} parent=1 // pred_fallthru
      _
    // Predicated region
    $region26: #{lstm_model_forward.1} parent=1 // pred_check
      _
    $region27: #{lstm_model_forward.1} parent=1 // pred_check_branch
      %31 = sbr.rel (0) target = $region29
    $region28: #{lstm_model_forward.1} parent=1 // pred_region
      _
    $region29: #{lstm_model_forward.1} parent=1 // pred_fallthru
      _
    // Predicated region
    $region30: #{lstm_model_forward.1} parent=1 // pred_check
      _
    $region31: #{lstm_model_forward.1} parent=1 // pred_check_branch
      %33 = sbr.rel (0) target = $region33
    $region32: #{lstm_model_forward.1} parent=1 // pred_region
      _
    $region33: #{lstm_model_forward.1} parent=1 // pred_fallthru
      _
    %v34 = vld [vmem:[%s0] sm:$0xff]
    %v35 = vld [vmem:[%s0 + $0x8] sm:$0xff]
    %v36 = vld [vmem:[%s0 + $0x10] sm:$0xff]
    %v37 = vld [vmem:[%s0 + $0x18] sm:$0xff]
    %v38 = vld [vmem:[%s0 + $0x20] sm:$0xff]
    %v39 = vld [vmem:[%s0 + $0x28] sm:$0xff]
    %v40 = vld [vmem:[%s0 + $0x30] sm:$0xff]
    %v41 = vld [vmem:[%s0 + $0x38] sm:$0xff]
    %v42 = vld [vmem:[%s3] sm:$0xf]
    %44 = vset.pattern.permute.xlu0 0
    %45 = vperm.xlu0 %44, %v34
    %v46 = vpop.permute.xlu0 %45
    %49 = vset.pattern.permute.xlu0 0
    %50 = vperm.xlu0 %49, %v35
    %v51 = vpop.permute.xlu0 %50
    %54 = vset.pattern.permute.xlu0 0
    %55 = vperm.xlu0 %54, %v36
    %v56 = vpop.permute.xlu0 %55
    %59 = vset.pattern.permute.xlu0 0
    %60 = vperm.xlu0 %59, %v37
    %v61 = vpop.permute.xlu0 %60
    %64 = vset.pattern.permute.xlu0 0
    %65 = vperm.xlu0 %64, %v38
    %v66 = vpop.permute.xlu0 %65
    %69 = vset.pattern.permute.xlu0 0
    %70 = vperm.xlu0 %69, %v39
    %v71 = vpop.permute.xlu0 %70
    %74 = vset.pattern.permute.xlu0 0
    %75 = vperm.xlu0 %74, %v40
    %v76 = vpop.permute.xlu0 %75
    %79 = vset.pattern.permute.xlu0 0
    %80 = vperm.xlu0 %79, %v41
    %v81 = vpop.permute.xlu0 %80
    %v84 = vlaneseq
    %v85 = vshrl.u32 %v84, 7
    %v86 = vsub.s32 0, %v85
    %v87 = vrot.slane %v42, %v86
    %v88 = vlaneseq
    %v89 = vshrl.u32 %v88, 7
    %v90 = vsub.s32 1, %v89
    %v91 = vrot.slane %v42, %v90
    %v92 = vlaneseq
    %v93 = vshrl.u32 %v92, 7
    %v94 = vsub.s32 2, %v93
    %v95 = vrot.slane %v42, %v94
    %v96 = vlaneseq
    %v97 = vshrl.u32 %v96, 7
    %v98 = vsub.s32 3, %v97
    %v99 = vrot.slane %v42, %v98
    %v104 = vmul.f32 %v46, %v87
    %v105 = vmul.f32 %v46, %v91
    %v106 = vmul.f32 %v46, %v95
    %v107 = vmul.f32 %v46, %v99
    %v108 = vmul.f32 %v51, %v87
    %v109 = vmul.f32 %v51, %v91
    %v110 = vmul.f32 %v51, %v95
    %v111 = vmul.f32 %v51, %v99
    %v112 = vmul.f32 %v56, %v87
    %v113 = vmul.f32 %v56, %v91
    %v114 = vmul.f32 %v56, %v95
    %v115 = vmul.f32 %v56, %v99
    %v116 = vmul.f32 %v61, %v87
    %v117 = vmul.f32 %v61, %v91
    %v118 = vmul.f32 %v61, %v95
    %v119 = vmul.f32 %v61, %v99
    %v120 = vmul.f32 %v66, %v87
    %v121 = vmul.f32 %v66, %v91
    %v122 = vmul.f32 %v66, %v95
    %v123 = vmul.f32 %v66, %v99
    %v124 = vmul.f32 %v71, %v87
    %v125 = vmul.f32 %v71, %v91
    %v126 = vmul.f32 %v71, %v95
    %v127 = vmul.f32 %v71, %v99
    %v128 = vmul.f32 %v76, %v87
    %v129 = vmul.f32 %v76, %v91
    %v130 = vmul.f32 %v76, %v95
    %v131 = vmul.f32 %v76, %v99
    %v132 = vmul.f32 %v81, %v87
    %v133 = vmul.f32 %v81, %v91
    %v134 = vmul.f32 %v81, %v95
    %v135 = vmul.f32 %v81, %v99
    %v136 = vld [vmem:[%s5] sm:$0xf]
    %v138 = vlaneseq
    %v139 = vshrl.u32 %v138, 7
    %v140 = vsub.s32 0, %v139
    %v141 = vrot.slane %v136, %v140
    %v142 = vlaneseq
    %v143 = vshrl.u32 %v142, 7
    %v144 = vsub.s32 1, %v143
    %v145 = vrot.slane %v136, %v144
    %v146 = vlaneseq
    %v147 = vshrl.u32 %v146, 7
    %v148 = vsub.s32 2, %v147
    %v149 = vrot.slane %v136, %v148
    %v150 = vlaneseq
    %v151 = vshrl.u32 %v150, 7
    %v152 = vsub.s32 3, %v151
    %v153 = vrot.slane %v136, %v152
    %v158 = vadd.f32 %v104, %v141
    %v159 = vadd.f32 %v105, %v145
    %v160 = vadd.f32 %v106, %v149
    %v161 = vadd.f32 %v107, %v153
    %v162 = vadd.f32 %v108, %v141
    %v163 = vadd.f32 %v109, %v145
    %v164 = vadd.f32 %v110, %v149
    %v165 = vadd.f32 %v111, %v153
    %v166 = vadd.f32 %v112, %v141
    %v167 = vadd.f32 %v113, %v145
    %v168 = vadd.f32 %v114, %v149
    %v169 = vadd.f32 %v115, %v153
    %v170 = vadd.f32 %v116, %v141
    %v171 = vadd.f32 %v117, %v145
    %v172 = vadd.f32 %v118, %v149
    %v173 = vadd.f32 %v119, %v153
    %v174 = vadd.f32 %v120, %v141
    %v175 = vadd.f32 %v121, %v145
    %v176 = vadd.f32 %v122, %v149
    %v177 = vadd.f32 %v123, %v153
    %v178 = vadd.f32 %v124, %v141
    %v179 = vadd.f32 %v125, %v145
    %v180 = vadd.f32 %v126, %v149
    %v181 = vadd.f32 %v127, %v153
    %v182 = vadd.f32 %v128, %v141
    %v183 = vadd.f32 %v129, %v145
    %v184 = vadd.f32 %v130, %v149
    %v185 = vadd.f32 %v131, %v153
    %v186 = vadd.f32 %v132, %v141
    %v187 = vadd.f32 %v133, %v145
    %v188 = vadd.f32 %v134, %v149
    %v189 = vadd.f32 %v135, %v153
    %190 = vst [vmem:[#allocation2] sm:$0xff] %v158
    %191 = vst [vmem:[#allocation2 + $0x8] sm:$0xff] %v159
    %192 = vst [vmem:[#allocation2 + $0x10] sm:$0xff] %v160
    %193 = vst [vmem:[#allocation2 + $0x18] sm:$0xff] %v161
    %194 = vst [vmem:[#allocation2 + $0x20] sm:$0xff] %v162
    %195 = vst [vmem:[#allocation2 + $0x28] sm:$0xff] %v163
    %196 = vst [vmem:[#allocation2 + $0x30] sm:$0xff] %v164
    %197 = vst [vmem:[#allocation2 + $0x38] sm:$0xff] %v165
    %198 = vst [vmem:[#allocation2 + $0x40] sm:$0xff] %v166
    %199 = vst [vmem:[#allocation2 + $0x48] sm:$0xff] %v167
    %200 = vst [vmem:[#allocation2 + $0x50] sm:$0xff] %v168
    %201 = vst [vmem:[#allocation2 + $0x58] sm:$0xff] %v169
    %202 = vst [vmem:[#allocation2 + $0x60] sm:$0xff] %v170
    %203 = vst [vmem:[#allocation2 + $0x68] sm:$0xff] %v171
    %204 = vst [vmem:[#allocation2 + $0x70] sm:$0xff] %v172
    %205 = vst [vmem:[#allocation2 + $0x78] sm:$0xff] %v173
    %206 = vst [vmem:[#allocation2 + $0x80] sm:$0xff] %v174
    %207 = vst [vmem:[#allocation2 + $0x88] sm:$0xff] %v175
    %208 = vst [vmem:[#allocation2 + $0x90] sm:$0xff] %v176
    %209 = vst [vmem:[#allocation2 + $0x98] sm:$0xff] %v177
    %210 = vst [vmem:[#allocation2 + $0xa0] sm:$0xff] %v178
    %211 = vst [vmem:[#allocation2 + $0xa8] sm:$0xff] %v179
    %212 = vst [vmem:[#allocation2 + $0xb0] sm:$0xff] %v180
    %213 = vst [vmem:[#allocation2 + $0xb8] sm:$0xff] %v181
    %214 = vst [vmem:[#allocation2 + $0xc0] sm:$0xff] %v182
    %215 = vst [vmem:[#allocation2 + $0xc8] sm:$0xff] %v183
    %216 = vst [vmem:[#allocation2 + $0xd0] sm:$0xff] %v184
    %217 = vst [vmem:[#allocation2 + $0xd8] sm:$0xff] %v185
    %218 = vst [vmem:[#allocation2 + $0xe0] sm:$0xff] %v186
    %219 = vst [vmem:[#allocation2 + $0xe8] sm:$0xff] %v187
    %220 = vst [vmem:[#allocation2 + $0xf0] sm:$0xff] %v188
    %221 = vst [vmem:[#allocation2 + $0xf8] sm:$0xff] %v189
    %v222 = vld [vmem:[%s1] sm:$0xff]
    %v223 = vld [vmem:[%s2] sm:$0xff]
    %s224 = smul.u32 0, 4
    %s225 = smul.addr %s224, 8
    %s226 = scalar_lea.vmem [#allocation2], %s225
    %v227 = vld [vmem:[%s226] sm:$0xff]
    %v228 = vld [vmem:[%s226 + $0x8] sm:$0xff]
    %v229 = vld [vmem:[%s226 + $0x10] sm:$0xff]
    %v230 = vld [vmem:[%s226 + $0x18] sm:$0xff]
    %v231 = vld [vmem:[%s4] sm:$0xff]
    %v232 = vld [vmem:[%s4 + $0x8] sm:$0xff]
    %v233 = vld [vmem:[%s4 + $0x10] sm:$0xff]
    %v234 = vld [vmem:[%s4 + $0x18] sm:$0xff]
    %v235 = vld [vmem:[%s4 + $0x20] sm:$0xff]
    %v236 = vld [vmem:[%s4 + $0x28] sm:$0xff]
    %v237 = vld [vmem:[%s4 + $0x30] sm:$0xff]
    %v238 = vld [vmem:[%s4 + $0x38] sm:$0xff]
    %v239 = vld [vmem:[%s4 + $0x40] sm:$0xff]
    %v240 = vld [vmem:[%s4 + $0x48] sm:$0xff]
    %v241 = vld [vmem:[%s4 + $0x50] sm:$0xff]
    %v242 = vld [vmem:[%s4 + $0x58] sm:$0xff]
    %v243 = vld [vmem:[%s4 + $0x60] sm:$0xff]
    %v244 = vld [vmem:[%s4 + $0x68] sm:$0xff]
    %v245 = vld [vmem:[%s4 + $0x70] sm:$0xff]
    %v246 = vld [vmem:[%s4 + $0x78] sm:$0xff]
    %v247 = vld [vmem:[%s4 + $0x80] sm:$0xff]
    %v248 = vld [vmem:[%s4 + $0x88] sm:$0xff]
    %v249 = vld [vmem:[%s4 + $0x90] sm:$0xff]
    %v250 = vld [vmem:[%s4 + $0x98] sm:$0xff]
    %v251 = vld [vmem:[%s4 + $0xa0] sm:$0xff]
    %v252 = vld [vmem:[%s4 + $0xa8] sm:$0xff]
    %v253 = vld [vmem:[%s4 + $0xb0] sm:$0xff]
    %v254 = vld [vmem:[%s4 + $0xb8] sm:$0xff]
    %v255 = vld [vmem:[%s4 + $0xc0] sm:$0xff]
    %v256 = vld [vmem:[%s4 + $0xc8] sm:$0xff]
    %v257 = vld [vmem:[%s4 + $0xd0] sm:$0xff]
    %v258 = vld [vmem:[%s4 + $0xd8] sm:$0xff]
    %v259 = vld [vmem:[%s4 + $0xe0] sm:$0xff]
    %v260 = vld [vmem:[%s4 + $0xe8] sm:$0xff]
    %v261 = vld [vmem:[%s4 + $0xf0] sm:$0xff]
    %v262 = vld [vmem:[%s4 + $0xf8] sm:$0xff]
    %v263 = vld [vmem:[%s4 + $0x100] sm:$0xff]
    %v264 = vld [vmem:[%s4 + $0x108] sm:$0xff]
    %v265 = vld [vmem:[%s4 + $0x110] sm:$0xff]
    %v266 = vld [vmem:[%s4 + $0x118] sm:$0xff]
    %v267 = vld [vmem:[%s4 + $0x120] sm:$0xff]
    %v268 = vld [vmem:[%s4 + $0x128] sm:$0xff]
    %v269 = vld [vmem:[%s4 + $0x130] sm:$0xff]
    %v270 = vld [vmem:[%s4 + $0x138] sm:$0xff]
    %v271 = vld [vmem:[%s4 + $0x140] sm:$0xff]
    %v272 = vld [vmem:[%s4 + $0x148] sm:$0xff]
    %v273 = vld [vmem:[%s4 + $0x150] sm:$0xff]
    %v274 = vld [vmem:[%s4 + $0x158] sm:$0xff]
    %v275 = vld [vmem:[%s4 + $0x160] sm:$0xff]
    %v276 = vld [vmem:[%s4 + $0x168] sm:$0xff]
    %v277 = vld [vmem:[%s4 + $0x170] sm:$0xff]
    %v278 = vld [vmem:[%s4 + $0x178] sm:$0xff]
    %v279 = vld [vmem:[%s4 + $0x180] sm:$0xff]
    %v280 = vld [vmem:[%s4 + $0x188] sm:$0xff]
    %v281 = vld [vmem:[%s4 + $0x190] sm:$0xff]
    %v282 = vld [vmem:[%s4 + $0x198] sm:$0xff]
    %v283 = vld [vmem:[%s4 + $0x1a0] sm:$0xff]
    %v284 = vld [vmem:[%s4 + $0x1a8] sm:$0xff]
    %v285 = vld [vmem:[%s4 + $0x1b0] sm:$0xff]
    %v286 = vld [vmem:[%s4 + $0x1b8] sm:$0xff]
    %v287 = vld [vmem:[%s4 + $0x1c0] sm:$0xff]
    %v288 = vld [vmem:[%s4 + $0x1c8] sm:$0xff]
    %v289 = vld [vmem:[%s4 + $0x1d0] sm:$0xff]
    %v290 = vld [vmem:[%s4 + $0x1d8] sm:$0xff]
    %v291 = vld [vmem:[%s4 + $0x1e0] sm:$0xff]
    %v292 = vld [vmem:[%s4 + $0x1e8] sm:$0xff]
    %v293 = vld [vmem:[%s4 + $0x1f0] sm:$0xff]
    %v294 = vld [vmem:[%s4 + $0x1f8] sm:$0xff]
    %295 = vmatprep.subr.mxu0 %v232
    %296 = vmatpush1.msra.mxu0 %v231
    %297 = vmatprep.subr.mxu0 %v236
    %298 = vmatpush1.msra.mxu0 %v235
    %299 = vmatprep.subr.mxu0 %v240
    %300 = vmatpush1.msra.mxu0 %v239
    %301 = vmatprep.subr.mxu0 %v244
    %302 = vmatpush1.msra.mxu0 %v243
    %303 = vmatprep.subr.mxu0 %v248
    %304 = vmatpush1.msra.mxu0 %v247
    %305 = vmatprep.subr.mxu0 %v252
    %306 = vmatpush1.msra.mxu0 %v251
    %307 = vmatprep.subr.mxu0 %v256
    %308 = vmatpush1.msra.mxu0 %v255
    %309 = vmatprep.subr.mxu0 %v260
    %310 = vmatpush1.msra.mxu0 %v259
    %311 = vmatprep.subr.mxu0 %v264
    %312 = vmatpush1.msra.mxu0 %v263
    %313 = vmatprep.subr.mxu0 %v268
    %314 = vmatpush1.msra.mxu0 %v267
    %315 = vmatprep.subr.mxu0 %v272
    %316 = vmatpush1.msra.mxu0 %v271
    %317 = vmatprep.subr.mxu0 %v276
    %318 = vmatpush1.msra.mxu0 %v275
    %319 = vmatprep.subr.mxu0 %v280
    %320 = vmatpush1.msra.mxu0 %v279
    %321 = vmatprep.subr.mxu0 %v284
    %322 = vmatpush1.msra.mxu0 %v283
    %323 = vmatprep.subr.mxu0 %v288
    %324 = vmatpush1.msra.mxu0 %v287
    %325 = vmatprep.subr.mxu0 %v292
    %326 = vmatpush1.msra.mxu0 %v291
    %327 = vmatprep.subr.mxu0 0.0
    %328 = vmatpush1.msra.mxu0 0.0
    %329 = vmatprep.subr.mxu0 0.0
    %330 = vmatpush1.msra.mxu0 0.0
    %331 = vmatprep.subr.mxu0 0.0
    %332 = vmatpush1.msra.mxu0 0.0
    %333 = vmatprep.subr.mxu0 0.0
    %334 = vmatpush1.msra.mxu0 0.0
    %335 = vmatprep.subr.mxu0 0.0
    %336 = vmatpush1.msra.mxu0 0.0
    %337 = vmatprep.subr.mxu0 0.0
    %338 = vmatpush1.msra.mxu0 0.0
    %339 = vmatprep.subr.mxu0 0.0
    %340 = vmatpush1.msra.mxu0 0.0
    %341 = vmatprep.subr.mxu0 0.0
    %342 = vmatpush1.msra.mxu0 0.0
    %343 = vmatprep.subr.mxu0 0.0
    %344 = vmatpush1.msra.mxu0 0.0
    %345 = vmatprep.subr.mxu0 0.0
    %346 = vmatpush1.msra.mxu0 0.0
    %347 = vmatprep.subr.mxu0 0.0
    %348 = vmatpush1.msra.mxu0 0.0
    %349 = vmatprep.subr.mxu0 0.0
    %350 = vmatpush1.msra.mxu0 0.0
    %351 = vmatprep.subr.mxu0 0.0
    %352 = vmatpush1.msra.mxu0 0.0
    %353 = vmatprep.subr.mxu0 0.0
    %354 = vmatpush1.msra.mxu0 0.0
    %355 = vmatprep.subr.mxu0 0.0
    %356 = vmatpush1.msra.mxu0 0.0
    %357 = vmatprep.subr.mxu0 0.0
    %358 = vmatpush1.msra.mxu0 0.0
    %359 = vmatprep.mubr.f32.mxu0 0.0
    %360 = vmatmul.mubr.f32.gmra.mrb[0].mxu0 %v222
    %v361 = vpop.f32.mrb[0].mxu0
    %v362 = vadd.f32 0.0, %v361
    %v363 = vpop.f32.mrb[0].mxu0
    %v364 = vadd.f32 0.0, %v363
    %365 = vdwg.mxu0
    %366 = vmatprep.subr.mxu0 %v234
    %367 = vmatpush1.msra.mxu0 %v233
    %368 = vmatprep.subr.mxu0 %v238
    %369 = vmatpush1.msra.mxu0 %v237
    %370 = vmatprep.subr.mxu0 %v242
    %371 = vmatpush1.msra.mxu0 %v241
    %372 = vmatprep.subr.mxu0 %v246
    %373 = vmatpush1.msra.mxu0 %v245
    %374 = vmatprep.subr.mxu0 %v250
    %375 = vmatpush1.msra.mxu0 %v249
    %376 = vmatprep.subr.mxu0 %v254
    %377 = vmatpush1.msra.mxu0 %v253
    %378 = vmatprep.subr.mxu0 %v258
    %379 = vmatpush1.msra.mxu0 %v257
    %380 = vmatprep.subr.mxu0 %v262
    %381 = vmatpush1.msra.mxu0 %v261
    %382 = vmatprep.subr.mxu0 %v266
    %383 = vmatpush1.msra.mxu0 %v265
    %384 = vmatprep.subr.mxu0 %v270
    %385 = vmatpush1.msra.mxu0 %v269
    %386 = vmatprep.subr.mxu0 %v274
    %387 = vmatpush1.msra.mxu0 %v273
    %388 = vmatprep.subr.mxu0 %v278
    %389 = vmatpush1.msra.mxu0 %v277
    %390 = vmatprep.subr.mxu0 %v282
    %391 = vmatpush1.msra.mxu0 %v281
    %392 = vmatprep.subr.mxu0 %v286
    %393 = vmatpush1.msra.mxu0 %v285
    %394 = vmatprep.subr.mxu0 %v290
    %395 = vmatpush1.msra.mxu0 %v289
    %396 = vmatprep.subr.mxu0 %v294
    %397 = vmatpush1.msra.mxu0 %v293
    %398 = vmatprep.subr.mxu0 0.0
    %399 = vmatpush1.msra.mxu0 0.0
    %400 = vmatprep.subr.mxu0 0.0
    %401 = vmatpush1.msra.mxu0 0.0
    %402 = vmatprep.subr.mxu0 0.0
    %403 = vmatpush1.msra.mxu0 0.0
    %404 = vmatprep.subr.mxu0 0.0
    %405 = vmatpush1.msra.mxu0 0.0
    %406 = vmatprep.subr.mxu0 0.0
    %407 = vmatpush1.msra.mxu0 0.0
    %408 = vmatprep.subr.mxu0 0.0
    %409 = vmatpush1.msra.mxu0 0.0
    %410 = vmatprep.subr.mxu0 0.0
    %411 = vmatpush1.msra.mxu0 0.0
    %412 = vmatprep.subr.mxu0 0.0
    %413 = vmatpush1.msra.mxu0 0.0
    %414 = vmatprep.subr.mxu0 0.0
    %415 = vmatpush1.msra.mxu0 0.0
    %416 = vmatprep.subr.mxu0 0.0
    %417 = vmatpush1.msra.mxu0 0.0
    %418 = vmatprep.subr.mxu0 0.0
    %419 = vmatpush1.msra.mxu0 0.0
    %420 = vmatprep.subr.mxu0 0.0
    %421 = vmatpush1.msra.mxu0 0.0
    %422 = vmatprep.subr.mxu0 0.0
    %423 = vmatpush1.msra.mxu0 0.0
    %424 = vmatprep.subr.mxu0 0.0
    %425 = vmatpush1.msra.mxu0 0.0
    %426 = vmatprep.subr.mxu0 0.0
    %427 = vmatpush1.msra.mxu0 0.0
    %428 = vmatprep.subr.mxu0 0.0
    %429 = vmatpush1.msra.mxu0 0.0
    %430 = vmatprep.mubr.f32.mxu0 0.0
    %431 = vmatmul.mubr.f32.gmra.mrb[0].mxu0 %v222
    %v432 = vpop.f32.mrb[0].mxu0
    %v433 = vadd.f32 0.0, %v432
    %v434 = vpop.f32.mrb[0].mxu0
    %v435 = vadd.f32 0.0, %v434
    %436 = vdwg.mxu0
    %v437 = vadd.f32 %v227, %v362
    %v438 = vadd.f32 %v228, %v364
    %v439 = vadd.f32 %v229, %v433
    %v440 = vadd.f32 %v230, %v435
    %v441 = vtanh.pop %v437
    %v442 = vtanh.pop %v438
    %v443 = vtanh.pop %v439
    %v444 = vtanh.pop %v440
    %v445 = vmul.f32 %v441, 0.5
    %v446 = vmul.f32 %v442, 0.5
    %v447 = vmul.f32 %v443, 0.5
    %v448 = vadd.f32 %v445, 0.5
    %v449 = vadd.f32 %v446, 0.5
    %v450 = vadd.f32 %v447, 0.5
    %v451 = vmul.f32 %v449, %v223
    %v452 = vmul.f32 %v448, %v444
    %v453 = vadd.f32 %v451, %v452
    %v454 = vtanh.pop %v453
    %v455 = vmul.f32 %v450, %v454
    %s456 = smul.u32 1, 4
    %s457 = smul.addr %s456, 8
    %s458 = scalar_lea.vmem [#allocation2], %s457
    %v459 = vld [vmem:[%s458] sm:$0xff]
    %v460 = vld [vmem:[%s458 + $0x8] sm:$0xff]
    %v461 = vld [vmem:[%s458 + $0x10] sm:$0xff]
    %v462 = vld [vmem:[%s458 + $0x18] sm:$0xff]
    %463 = vmatprep.subr.mxu0 %v232
    %464 = vmatpush1.msra.mxu0 %v231
    %465 = vmatprep.subr.mxu0 %v236
    %466 = vmatpush1.msra.mxu0 %v235
    %467 = vmatprep.subr.mxu0 %v240
    %468 = vmatpush1.msra.mxu0 %v239
    %469 = vmatprep.subr.mxu0 %v244
    %470 = vmatpush1.msra.mxu0 %v243
    %471 = vmatprep.subr.mxu0 %v248
    %472 = vmatpush1.msra.mxu0 %v247
    %473 = vmatprep.subr.mxu0 %v252
    %474 = vmatpush1.msra.mxu0 %v251
    %475 = vmatprep.subr.mxu0 %v256
    %476 = vmatpush1.msra.mxu0 %v255
    %477 = vmatprep.subr.mxu0 %v260
    %478 = vmatpush1.msra.mxu0 %v259
    %479 = vmatprep.subr.mxu0 %v264
    %480 = vmatpush1.msra.mxu0 %v263
    %481 = vmatprep.subr.mxu0 %v268
    %482 = vmatpush1.msra.mxu0 %v267
    %483 = vmatprep.subr.mxu0 %v272
    %484 = vmatpush1.msra.mxu0 %v271
    %485 = vmatprep.subr.mxu0 %v276
    %486 = vmatpush1.msra.mxu0 %v275
    %487 = vmatprep.subr.mxu0 %v280
    %488 = vmatpush1.msra.mxu0 %v279
    %489 = vmatprep.subr.mxu0 %v284
    %490 = vmatpush1.msra.mxu0 %v283
    %491 = vmatprep.subr.mxu0 %v288
    %492 = vmatpush1.msra.mxu0 %v287
    %493 = vmatprep.subr.mxu0 %v292
    %494 = vmatpush1.msra.mxu0 %v291
    %495 = vmatprep.subr.mxu0 0.0
    %496 = vmatpush1.msra.mxu0 0.0
    %497 = vmatprep.subr.mxu0 0.0
    %498 = vmatpush1.msra.mxu0 0.0
    %499 = vmatprep.subr.mxu0 0.0
    %500 = vmatpush1.msra.mxu0 0.0
    %501 = vmatprep.subr.mxu0 0.0
    %502 = vmatpush1.msra.mxu0 0.0
    %503 = vmatprep.subr.mxu0 0.0
    %504 = vmatpush1.msra.mxu0 0.0
    %505 = vmatprep.subr.mxu0 0.0
    %506 = vmatpush1.msra.mxu0 0.0
    %507 = vmatprep.subr.mxu0 0.0
    %508 = vmatpush1.msra.mxu0 0.0
    %509 = vmatprep.subr.mxu0 0.0
    %510 = vmatpush1.msra.mxu0 0.0
    %511 = vmatprep.subr.mxu0 0.0
    %512 = vmatpush1.msra.mxu0 0.0
    %513 = vmatprep.subr.mxu0 0.0
    %514 = vmatpush1.msra.mxu0 0.0
    %515 = vmatprep.subr.mxu0 0.0
    %516 = vmatpush1.msra.mxu0 0.0
    %517 = vmatprep.subr.mxu0 0.0
    %518 = vmatpush1.msra.mxu0 0.0
    %519 = vmatprep.subr.mxu0 0.0
    %520 = vmatpush1.msra.mxu0 0.0
    %521 = vmatprep.subr.mxu0 0.0
    %522 = vmatpush1.msra.mxu0 0.0
    %523 = vmatprep.subr.mxu0 0.0
    %524 = vmatpush1.msra.mxu0 0.0
    %525 = vmatprep.subr.mxu0 0.0
    %526 = vmatpush1.msra.mxu0 0.0
    %527 = vmatprep.mubr.f32.mxu0 0.0
    %528 = vmatmul.mubr.f32.gmra.mrb[0].mxu0 %v455
    %v529 = vpop.f32.mrb[0].mxu0
    %v530 = vadd.f32 0.0, %v529
    %v531 = vpop.f32.mrb[0].mxu0
    %v532 = vadd.f32 0.0, %v531
    %533 = vdwg.mxu0
    %534 = vmatprep.subr.mxu0 %v234
    %535 = vmatpush1.msra.mxu0 %v233
    %536 = vmatprep.subr.mxu0 %v238
    %537 = vmatpush1.msra.mxu0 %v237
    %538 = vmatprep.subr.mxu0 %v242
    %539 = vmatpush1.msra.mxu0 %v241
    %540 = vmatprep.subr.mxu0 %v246
    %541 = vmatpush1.msra.mxu0 %v245
    %542 = vmatprep.subr.mxu0 %v250
    %543 = vmatpush1.msra.mxu0 %v249
    %544 = vmatprep.subr.mxu0 %v254
    %545 = vmatpush1.msra.mxu0 %v253
    %546 = vmatprep.subr.mxu0 %v258
    %547 = vmatpush1.msra.mxu0 %v257
    %548 = vmatprep.subr.mxu0 %v262
    %549 = vmatpush1.msra.mxu0 %v261
    %550 = vmatprep.subr.mxu0 %v266
    %551 = vmatpush1.msra.mxu0 %v265
    %552 = vmatprep.subr.mxu0 %v270
    %553 = vmatpush1.msra.mxu0 %v269
    %554 = vmatprep.subr.mxu0 %v274
    %555 = vmatpush1.msra.mxu0 %v273
    %556 = vmatprep.subr.mxu0 %v278
    %557 = vmatpush1.msra.mxu0 %v277
    %558 = vmatprep.subr.mxu0 %v282
    %559 = vmatpush1.msra.mxu0 %v281
    %560 = vmatprep.subr.mxu0 %v286
    %561 = vmatpush1.msra.mxu0 %v285
    %562 = vmatprep.subr.mxu0 %v290
    %563 = vmatpush1.msra.mxu0 %v289
    %564 = vmatprep.subr.mxu0 %v294
    %565 = vmatpush1.msra.mxu0 %v293
    %566 = vmatprep.subr.mxu0 0.0
    %567 = vmatpush1.msra.mxu0 0.0
    %568 = vmatprep.subr.mxu0 0.0
    %569 = vmatpush1.msra.mxu0 0.0
    %570 = vmatprep.subr.mxu0 0.0
    %571 = vmatpush1.msra.mxu0 0.0
    %572 = vmatprep.subr.mxu0 0.0
    %573 = vmatpush1.msra.mxu0 0.0
    %574 = vmatprep.subr.mxu0 0.0
    %575 = vmatpush1.msra.mxu0 0.0
    %576 = vmatprep.subr.mxu0 0.0
    %577 = vmatpush1.msra.mxu0 0.0
    %578 = vmatprep.subr.mxu0 0.0
    %579 = vmatpush1.msra.mxu0 0.0
    %580 = vmatprep.subr.mxu0 0.0
    %581 = vmatpush1.msra.mxu0 0.0
    %582 = vmatprep.subr.mxu0 0.0
    %583 = vmatpush1.msra.mxu0 0.0
    %584 = vmatprep.subr.mxu0 0.0
    %585 = vmatpush1.msra.mxu0 0.0
    %586 = vmatprep.subr.mxu0 0.0
    %587 = vmatpush1.msra.mxu0 0.0
    %588 = vmatprep.subr.mxu0 0.0
    %589 = vmatpush1.msra.mxu0 0.0
    %590 = vmatprep.subr.mxu0 0.0
    %591 = vmatpush1.msra.mxu0 0.0
    %592 = vmatprep.subr.mxu0 0.0
    %593 = vmatpush1.msra.mxu0 0.0
    %594 = vmatprep.subr.mxu0 0.0
    %595 = vmatpush1.msra.mxu0 0.0
    %596 = vmatprep.subr.mxu0 0.0
    %597 = vmatpush1.msra.mxu0 0.0
    %598 = vmatprep.mubr.f32.mxu0 0.0
    %599 = vmatmul.mubr.f32.gmra.mrb[0].mxu0 %v455
    %v600 = vpop.f32.mrb[0].mxu0
    %v601 = vadd.f32 0.0, %v600
    %v602 = vpop.f32.mrb[0].mxu0
    %v603 = vadd.f32 0.0, %v602
    %604 = vdwg.mxu0
    %v605 = vadd.f32 %v459, %v530
    %v606 = vadd.f32 %v460, %v532
    %v607 = vadd.f32 %v461, %v601
    %v608 = vadd.f32 %v462, %v603
    %v609 = vtanh.pop %v605
    %v610 = vtanh.pop %v606
    %v611 = vtanh.pop %v607
    %v612 = vtanh.pop %v608
    %v613 = vmul.f32 %v609, 0.5
    %v614 = vmul.f32 %v610, 0.5
    %v615 = vmul.f32 %v611, 0.5
    %v616 = vadd.f32 %v613, 0.5
    %v617 = vadd.f32 %v614, 0.5
    %v618 = vadd.f32 %v615, 0.5
    %v619 = vmul.f32 %v617, %v453
    %v620 = vmul.f32 %v616, %v612
    %v621 = vadd.f32 %v619, %v620
    %v622 = vtanh.pop %v621
    %v623 = vmul.f32 %v618, %v622
    %s624 = smul.u32 2, 4
    %s625 = smul.addr %s624, 8
    %s626 = scalar_lea.vmem [#allocation2], %s625
    %v627 = vld [vmem:[%s626] sm:$0xff]
    %v628 = vld [vmem:[%s626 + $0x8] sm:$0xff]
    %v629 = vld [vmem:[%s626 + $0x10] sm:$0xff]
    %v630 = vld [vmem:[%s626 + $0x18] sm:$0xff]
    %631 = vmatprep.subr.mxu0 %v232
    %632 = vmatpush1.msra.mxu0 %v231
    %633 = vmatprep.subr.mxu0 %v236
    %634 = vmatpush1.msra.mxu0 %v235
    %635 = vmatprep.subr.mxu0 %v240
    %636 = vmatpush1.msra.mxu0 %v239
    %637 = vmatprep.subr.mxu0 %v244
    %638 = vmatpush1.msra.mxu0 %v243
    %639 = vmatprep.subr.mxu0 %v248
    %640 = vmatpush1.msra.mxu0 %v247
    %641 = vmatprep.subr.mxu0 %v252
    %642 = vmatpush1.msra.mxu0 %v251
    %643 = vmatprep.subr.mxu0 %v256
    %644 = vmatpush1.msra.mxu0 %v255
    %645 = vmatprep.subr.mxu0 %v260
    %646 = vmatpush1.msra.mxu0 %v259
    %647 = vmatprep.subr.mxu0 %v264
    %648 = vmatpush1.msra.mxu0 %v263
    %649 = vmatprep.subr.mxu0 %v268
    %650 = vmatpush1.msra.mxu0 %v267
    %651 = vmatprep.subr.mxu0 %v272
    %652 = vmatpush1.msra.mxu0 %v271
    %653 = vmatprep.subr.mxu0 %v276
    %654 = vmatpush1.msra.mxu0 %v275
    %655 = vmatprep.subr.mxu0 %v280
    %656 = vmatpush1.msra.mxu0 %v279
    %657 = vmatprep.subr.mxu0 %v284
    %658 = vmatpush1.msra.mxu0 %v283
    %659 = vmatprep.subr.mxu0 %v288
    %660 = vmatpush1.msra.mxu0 %v287
    %661 = vmatprep.subr.mxu0 %v292
    %662 = vmatpush1.msra.mxu0 %v291
    %663 = vmatprep.subr.mxu0 0.0
    %664 = vmatpush1.msra.mxu0 0.0
    %665 = vmatprep.subr.mxu0 0.0
    %666 = vmatpush1.msra.mxu0 0.0
    %667 = vmatprep.subr.mxu0 0.0
    %668 = vmatpush1.msra.mxu0 0.0
    %669 = vmatprep.subr.mxu0 0.0
    %670 = vmatpush1.msra.mxu0 0.0
    %671 = vmatprep.subr.mxu0 0.0
    %672 = vmatpush1.msra.mxu0 0.0
    %673 = vmatprep.subr.mxu0 0.0
    %674 = vmatpush1.msra.mxu0 0.0
    %675 = vmatprep.subr.mxu0 0.0
    %676 = vmatpush1.msra.mxu0 0.0
    %677 = vmatprep.subr.mxu0 0.0
    %678 = vmatpush1.msra.mxu0 0.0
    %679 = vmatprep.subr.mxu0 0.0
    %680 = vmatpush1.msra.mxu0 0.0
    %681 = vmatprep.subr.mxu0 0.0
    %682 = vmatpush1.msra.mxu0 0.0
    %683 = vmatprep.subr.mxu0 0.0
    %684 = vmatpush1.msra.mxu0 0.0
    %685 = vmatprep.subr.mxu0 0.0
    %686 = vmatpush1.msra.mxu0 0.0
    %687 = vmatprep.subr.mxu0 0.0
    %688 = vmatpush1.msra.mxu0 0.0
    %689 = vmatprep.subr.mxu0 0.0
    %690 = vmatpush1.msra.mxu0 0.0
    %691 = vmatprep.subr.mxu0 0.0
    %692 = vmatpush1.msra.mxu0 0.0
    %693 = vmatprep.subr.mxu0 0.0
    %694 = vmatpush1.msra.mxu0 0.0
    %695 = vmatprep.mubr.f32.mxu0 0.0
    %696 = vmatmul.mubr.f32.gmra.mrb[0].mxu0 %v623
    %v697 = vpop.f32.mrb[0].mxu0
    %v698 = vadd.f32 0.0, %v697
    %v699 = vpop.f32.mrb[0].mxu0
    %v700 = vadd.f32 0.0, %v699
    %701 = vdwg.mxu0
    %702 = vmatprep.subr.mxu0 %v234
    %703 = vmatpush1.msra.mxu0 %v233
    %704 = vmatprep.subr.mxu0 %v238
    %705 = vmatpush1.msra.mxu0 %v237
    %706 = vmatprep.subr.mxu0 %v242
    %707 = vmatpush1.msra.mxu0 %v241
    %708 = vmatprep.subr.mxu0 %v246
    %709 = vmatpush1.msra.mxu0 %v245
    %710 = vmatprep.subr.mxu0 %v250
    %711 = vmatpush1.msra.mxu0 %v249
    %712 = vmatprep.subr.mxu0 %v254
    %713 = vmatpush1.msra.mxu0 %v253
    %714 = vmatprep.subr.mxu0 %v258
    %715 = vmatpush1.msra.mxu0 %v257
    %716 = vmatprep.subr.mxu0 %v262
    %717 = vmatpush1.msra.mxu0 %v261
    %718 = vmatprep.subr.mxu0 %v266
    %719 = vmatpush1.msra.mxu0 %v265
    %720 = vmatprep.subr.mxu0 %v270
    %721 = vmatpush1.msra.mxu0 %v269
    %722 = vmatprep.subr.mxu0 %v274
    %723 = vmatpush1.msra.mxu0 %v273
    %724 = vmatprep.subr.mxu0 %v278
    %725 = vmatpush1.msra.mxu0 %v277
    %726 = vmatprep.subr.mxu0 %v282
    %727 = vmatpush1.msra.mxu0 %v281
    %728 = vmatprep.subr.mxu0 %v286
    %729 = vmatpush1.msra.mxu0 %v285
    %730 = vmatprep.subr.mxu0 %v290
    %731 = vmatpush1.msra.mxu0 %v289
    %732 = vmatprep.subr.mxu0 %v294
    %733 = vmatpush1.msra.mxu0 %v293
    %734 = vmatprep.subr.mxu0 0.0
    %735 = vmatpush1.msra.mxu0 0.0
    %736 = vmatprep.subr.mxu0 0.0
    %737 = vmatpush1.msra.mxu0 0.0
    %738 = vmatprep.subr.mxu0 0.0
    %739 = vmatpush1.msra.mxu0 0.0
    %740 = vmatprep.subr.mxu0 0.0
    %741 = vmatpush1.msra.mxu0 0.0
    %742 = vmatprep.subr.mxu0 0.0
    %743 = vmatpush1.msra.mxu0 0.0
    %744 = vmatprep.subr.mxu0 0.0
    %745 = vmatpush1.msra.mxu0 0.0
    %746 = vmatprep.subr.mxu0 0.0
    %747 = vmatpush1.msra.mxu0 0.0
    %748 = vmatprep.subr.mxu0 0.0
    %749 = vmatpush1.msra.mxu0 0.0
    %750 = vmatprep.subr.mxu0 0.0
    %751 = vmatpush1.msra.mxu0 0.0
    %752 = vmatprep.subr.mxu0 0.0
    %753 = vmatpush1.msra.mxu0 0.0
    %754 = vmatprep.subr.mxu0 0.0
    %755 = vmatpush1.msra.mxu0 0.0
    %756 = vmatprep.subr.mxu0 0.0
    %757 = vmatpush1.msra.mxu0 0.0
    %758 = vmatprep.subr.mxu0 0.0
    %759 = vmatpush1.msra.mxu0 0.0
    %760 = vmatprep.subr.mxu0 0.0
    %761 = vmatpush1.msra.mxu0 0.0
    %762 = vmatprep.subr.mxu0 0.0
    %763 = vmatpush1.msra.mxu0 0.0
    %764 = vmatprep.subr.mxu0 0.0
    %765 = vmatpush1.msra.mxu0 0.0
    %766 = vmatprep.mubr.f32.mxu0 0.0
    %767 = vmatmul.mubr.f32.gmra.mrb[0].mxu0 %v623
    %v768 = vpop.f32.mrb[0].mxu0
    %v769 = vadd.f32 0.0, %v768
    %v770 = vpop.f32.mrb[0].mxu0
    %v771 = vadd.f32 0.0, %v770
    %772 = vdwg.mxu0
    %v773 = vadd.f32 %v627, %v698
    %v774 = vadd.f32 %v628, %v700
    %v775 = vadd.f32 %v629, %v769
    %v776 = vadd.f32 %v630, %v771
    %v777 = vtanh.pop %v773
    %v778 = vtanh.pop %v774
    %v779 = vtanh.pop %v775
    %v780 = vtanh.pop %v776
    %v781 = vmul.f32 %v777, 0.5
    %v782 = vmul.f32 %v778, 0.5
    %v783 = vmul.f32 %v779, 0.5
    %v784 = vadd.f32 %v781, 0.5
    %v785 = vadd.f32 %v782, 0.5
    %v786 = vadd.f32 %v783, 0.5
    %v787 = vmul.f32 %v785, %v621
    %v788 = vmul.f32 %v784, %v780
    %v789 = vadd.f32 %v787, %v788
    %v790 = vtanh.pop %v789
    %v791 = vmul.f32 %v786, %v790
    %s792 = smul.u32 3, 4
    %s793 = smul.addr %s792, 8
    %s794 = scalar_lea.vmem [#allocation2], %s793
    %v795 = vld [vmem:[%s794] sm:$0xff]
    %v796 = vld [vmem:[%s794 + $0x8] sm:$0xff]
    %v797 = vld [vmem:[%s794 + $0x10] sm:$0xff]
    %v798 = vld [vmem:[%s794 + $0x18] sm:$0xff]
    %799 = vmatprep.subr.mxu0 %v232
    %800 = vmatpush1.msra.mxu0 %v231
    %801 = vmatprep.subr.mxu0 %v236
    %802 = vmatpush1.msra.mxu0 %v235
    %803 = vmatprep.subr.mxu0 %v240
    %804 = vmatpush1.msra.mxu0 %v239
    %805 = vmatprep.subr.mxu0 %v244
    %806 = vmatpush1.msra.mxu0 %v243
    %807 = vmatprep.subr.mxu0 %v248
    %808 = vmatpush1.msra.mxu0 %v247
    %809 = vmatprep.subr.mxu0 %v252
    %810 = vmatpush1.msra.mxu0 %v251
    %811 = vmatprep.subr.mxu0 %v256
    %812 = vmatpush1.msra.mxu0 %v255
    %813 = vmatprep.subr.mxu0 %v260
    %814 = vmatpush1.msra.mxu0 %v259
    %815 = vmatprep.subr.mxu0 %v264
    %816 = vmatpush1.msra.mxu0 %v263
    %817 = vmatprep.subr.mxu0 %v268
    %818 = vmatpush1.msra.mxu0 %v267
    %819 = vmatprep.subr.mxu0 %v272
    %820 = vmatpush1.msra.mxu0 %v271
    %821 = vmatprep.subr.mxu0 %v276
    %822 = vmatpush1.msra.mxu0 %v275
    %823 = vmatprep.subr.mxu0 %v280
    %824 = vmatpush1.msra.mxu0 %v279
    %825 = vmatprep.subr.mxu0 %v284
    %826 = vmatpush1.msra.mxu0 %v283
    %827 = vmatprep.subr.mxu0 %v288
    %828 = vmatpush1.msra.mxu0 %v287
    %829 = vmatprep.subr.mxu0 %v292
    %830 = vmatpush1.msra.mxu0 %v291
    %831 = vmatprep.subr.mxu0 0.0
    %832 = vmatpush1.msra.mxu0 0.0
    %833 = vmatprep.subr.mxu0 0.0
    %834 = vmatpush1.msra.mxu0 0.0
    %835 = vmatprep.subr.mxu0 0.0
    %836 = vmatpush1.msra.mxu0 0.0
    %837 = vmatprep.subr.mxu0 0.0
    %838 = vmatpush1.msra.mxu0 0.0
    %839 = vmatprep.subr.mxu0 0.0
    %840 = vmatpush1.msra.mxu0 0.0
    %841 = vmatprep.subr.mxu0 0.0
    %842 = vmatpush1.msra.mxu0 0.0
    %843 = vmatprep.subr.mxu0 0.0
    %844 = vmatpush1.msra.mxu0 0.0
    %845 = vmatprep.subr.mxu0 0.0
    %846 = vmatpush1.msra.mxu0 0.0
    %847 = vmatprep.subr.mxu0 0.0
    %848 = vmatpush1.msra.mxu0 0.0
    %849 = vmatprep.subr.mxu0 0.0
    %850 = vmatpush1.msra.mxu0 0.0
    %851 = vmatprep.subr.mxu0 0.0
    %852 = vmatpush1.msra.mxu0 0.0
    %853 = vmatprep.subr.mxu0 0.0
    %854 = vmatpush1.msra.mxu0 0.0
    %855 = vmatprep.subr.mxu0 0.0
    %856 = vmatpush1.msra.mxu0 0.0
    %857 = vmatprep.subr.mxu0 0.0
    %858 = vmatpush1.msra.mxu0 0.0
    %859 = vmatprep.subr.mxu0 0.0
    %860 = vmatpush1.msra.mxu0 0.0
    %861 = vmatprep.subr.mxu0 0.0
    %862 = vmatpush1.msra.mxu0 0.0
    %863 = vmatprep.mubr.f32.mxu0 0.0
    %864 = vmatmul.mubr.f32.gmra.mrb[0].mxu0 %v791
    %v865 = vpop.f32.mrb[0].mxu0
    %v866 = vadd.f32 0.0, %v865
    %v867 = vpop.f32.mrb[0].mxu0
    %v868 = vadd.f32 0.0, %v867
    %869 = vdwg.mxu0
    %870 = vmatprep.subr.mxu0 %v234
    %871 = vmatpush1.msra.mxu0 %v233
    %872 = vmatprep.subr.mxu0 %v238
    %873 = vmatpush1.msra.mxu0 %v237
    %874 = vmatprep.subr.mxu0 %v242
    %875 = vmatpush1.msra.mxu0 %v241
    %876 = vmatprep.subr.mxu0 %v246
    %877 = vmatpush1.msra.mxu0 %v245
    %878 = vmatprep.subr.mxu0 %v250
    %879 = vmatpush1.msra.mxu0 %v249
    %880 = vmatprep.subr.mxu0 %v254
    %881 = vmatpush1.msra.mxu0 %v253
    %882 = vmatprep.subr.mxu0 %v258
    %883 = vmatpush1.msra.mxu0 %v257
    %884 = vmatprep.subr.mxu0 %v262
    %885 = vmatpush1.msra.mxu0 %v261
    %886 = vmatprep.subr.mxu0 %v266
    %887 = vmatpush1.msra.mxu0 %v265
    %888 = vmatprep.subr.mxu0 %v270
    %889 = vmatpush1.msra.mxu0 %v269
    %890 = vmatprep.subr.mxu0 %v274
    %891 = vmatpush1.msra.mxu0 %v273
    %892 = vmatprep.subr.mxu0 %v278
    %893 = vmatpush1.msra.mxu0 %v277
    %894 = vmatprep.subr.mxu0 %v282
    %895 = vmatpush1.msra.mxu0 %v281
    %896 = vmatprep.subr.mxu0 %v286
    %897 = vmatpush1.msra.mxu0 %v285
    %898 = vmatprep.subr.mxu0 %v290
    %899 = vmatpush1.msra.mxu0 %v289
    %900 = vmatprep.subr.mxu0 %v294
    %901 = vmatpush1.msra.mxu0 %v293
    %902 = vmatprep.subr.mxu0 0.0
    %903 = vmatpush1.msra.mxu0 0.0
    %904 = vmatprep.subr.mxu0 0.0
    %905 = vmatpush1.msra.mxu0 0.0
    %906 = vmatprep.subr.mxu0 0.0
    %907 = vmatpush1.msra.mxu0 0.0
    %908 = vmatprep.subr.mxu0 0.0
    %909 = vmatpush1.msra.mxu0 0.0
    %910 = vmatprep.subr.mxu0 0.0
    %911 = vmatpush1.msra.mxu0 0.0
    %912 = vmatprep.subr.mxu0 0.0
    %913 = vmatpush1.msra.mxu0 0.0
    %914 = vmatprep.subr.mxu0 0.0
    %915 = vmatpush1.msra.mxu0 0.0
    %916 = vmatprep.subr.mxu0 0.0
    %917 = vmatpush1.msra.mxu0 0.0
    %918 = vmatprep.subr.mxu0 0.0
    %919 = vmatpush1.msra.mxu0 0.0
    %920 = vmatprep.subr.mxu0 0.0
    %921 = vmatpush1.msra.mxu0 0.0
    %922 = vmatprep.subr.mxu0 0.0
    %923 = vmatpush1.msra.mxu0 0.0
    %924 = vmatprep.subr.mxu0 0.0
    %925 = vmatpush1.msra.mxu0 0.0
    %926 = vmatprep.subr.mxu0 0.0
    %927 = vmatpush1.msra.mxu0 0.0
    %928 = vmatprep.subr.mxu0 0.0
    %929 = vmatpush1.msra.mxu0 0.0
    %930 = vmatprep.subr.mxu0 0.0
    %931 = vmatpush1.msra.mxu0 0.0
    %932 = vmatprep.subr.mxu0 0.0
    %933 = vmatpush1.msra.mxu0 0.0
    %934 = vmatprep.mubr.f32.mxu0 0.0
    %935 = vmatmul.mubr.f32.gmra.mrb[0].mxu0 %v791
    %v936 = vpop.f32.mrb[0].mxu0
    %v937 = vadd.f32 0.0, %v936
    %v938 = vpop.f32.mrb[0].mxu0
    %v939 = vadd.f32 0.0, %v938
    %940 = vdwg.mxu0
    %v941 = vadd.f32 %v795, %v866
    %v942 = vadd.f32 %v796, %v868
    %v943 = vadd.f32 %v797, %v937
    %v944 = vadd.f32 %v798, %v939
    %v945 = vtanh.pop %v941
    %v946 = vtanh.pop %v942
    %v947 = vtanh.pop %v943
    %v948 = vtanh.pop %v944
    %v949 = vmul.f32 %v945, 0.5
    %v950 = vmul.f32 %v946, 0.5
    %v951 = vmul.f32 %v947, 0.5
    %v952 = vadd.f32 %v949, 0.5
    %v953 = vadd.f32 %v950, 0.5
    %v954 = vadd.f32 %v951, 0.5
    %v955 = vmul.f32 %v953, %v789
    %v956 = vmul.f32 %v952, %v948
    %v957 = vadd.f32 %v955, %v956
    %v958 = vtanh.pop %v957
    %v959 = vmul.f32 %v954, %v958
    %s960 = smul.u32 4, 4
    %s961 = smul.addr %s960, 8
    %s962 = scalar_lea.vmem [#allocation2], %s961
    %v963 = vld [vmem:[%s962] sm:$0xff]
    %v964 = vld [vmem:[%s962 + $0x8] sm:$0xff]
    %v965 = vld [vmem:[%s962 + $0x10] sm:$0xff]
    %v966 = vld [vmem:[%s962 + $0x18] sm:$0xff]
    %967 = vmatprep.subr.mxu0 %v232
    %968 = vmatpush1.msra.mxu0 %v231
    %969 = vmatprep.subr.mxu0 %v236
    %970 = vmatpush1.msra.mxu0 %v235
    %971 = vmatprep.subr.mxu0 %v240
    %972 = vmatpush1.msra.mxu0 %v239
    %973 = vmatprep.subr.mxu0 %v244
    %974 = vmatpush1.msra.mxu0 %v243
    %975 = vmatprep.subr.mxu0 %v248
    %976 = vmatpush1.msra.mxu0 %v247
    %977 = vmatprep.subr.mxu0 %v252
    %978 = vmatpush1.msra.mxu0 %v251
    %979 = vmatprep.subr.mxu0 %v256
    %980 = vmatpush1.msra.mxu0 %v255
    %981 = vmatprep.subr.mxu0 %v260
    %982 = vmatpush1.msra.mxu0 %v259
    %983 = vmatprep.subr.mxu0 %v264
    %984 = vmatpush1.msra.mxu0 %v263
    %985 = vmatprep.subr.mxu0 %v268
    %986 = vmatpush1.msra.mxu0 %v267
    %987 = vmatprep.subr.mxu0 %v272
    %988 = vmatpush1.msra.mxu0 %v271
    %989 = vmatprep.subr.mxu0 %v276
    %990 = vmatpush1.msra.mxu0 %v275
    %991 = vmatprep.subr.mxu0 %v280
    %992 = vmatpush1.msra.mxu0 %v279
    %993 = vmatprep.subr.mxu0 %v284
    %994 = vmatpush1.msra.mxu0 %v283
    %995 = vmatprep.subr.mxu0 %v288
    %996 = vmatpush1.msra.mxu0 %v287
    %997 = vmatprep.subr.mxu0 %v292
    %998 = vmatpush1.msra.mxu0 %v291
    %999 = vmatprep.subr.mxu0 0.0
    %1000 = vmatpush1.msra.mxu0 0.0
    %1001 = vmatprep.subr.mxu0 0.0
    %1002 = vmatpush1.msra.mxu0 0.0
    %1003 = vmatprep.subr.mxu0 0.0
    %1004 = vmatpush1.msra.mxu0 0.0
    %1005 = vmatprep.subr.mxu0 0.0
    %1006 = vmatpush1.msra.mxu0 0.0
    %1007 = vmatprep.subr.mxu0 0.0
    %1008 = vmatpush1.msra.mxu0 0.0
    %1009 = vmatprep.subr.mxu0 0.0
    %1010 = vmatpush1.msra.mxu0 0.0
    %1011 = vmatprep.subr.mxu0 0.0
    %1012 = vmatpush1.msra.mxu0 0.0
    %1013 = vmatprep.subr.mxu0 0.0
    %1014 = vmatpush1.msra.mxu0 0.0
    %1015 = vmatprep.subr.mxu0 0.0
    %1016 = vmatpush1.msra.mxu0 0.0
    %1017 = vmatprep.subr.mxu0 0.0
    %1018 = vmatpush1.msra.mxu0 0.0
    %1019 = vmatprep.subr.mxu0 0.0
    %1020 = vmatpush1.msra.mxu0 0.0
    %1021 = vmatprep.subr.mxu0 0.0
    %1022 = vmatpush1.msra.mxu0 0.0
    %1023 = vmatprep.subr.mxu0 0.0
    %1024 = vmatpush1.msra.mxu0 0.0
    %1025 = vmatprep.subr.mxu0 0.0
    %1026 = vmatpush1.msra.mxu0 0.0
    %1027 = vmatprep.subr.mxu0 0.0
    %1028 = vmatpush1.msra.mxu0 0.0
    %1029 = vmatprep.subr.mxu0 0.0
    %1030 = vmatpush1.msra.mxu0 0.0
    %1031 = vmatprep.mubr.f32.mxu0 0.0
    %1032 = vmatmul.mubr.f32.gmra.mrb[0].mxu0 %v959
    %v1033 = vpop.f32.mrb[0].mxu0
    %v1034 = vadd.f32 0.0, %v1033
    %v1035 = vpop.f32.mrb[0].mxu0
    %v1036 = vadd.f32 0.0, %v1035
    %1037 = vdwg.mxu0
    %1038 = vmatprep.subr.mxu0 %v234
    %1039 = vmatpush1.msra.mxu0 %v233
    %1040 = vmatprep.subr.mxu0 %v238
    %1041 = vmatpush1.msra.mxu0 %v237
    %1042 = vmatprep.subr.mxu0 %v242
    %1043 = vmatpush1.msra.mxu0 %v241
    %1044 = vmatprep.subr.mxu0 %v246
    %1045 = vmatpush1.msra.mxu0 %v245
    %1046 = vmatprep.subr.mxu0 %v250
    %1047 = vmatpush1.msra.mxu0 %v249
    %1048 = vmatprep.subr.mxu0 %v254
    %1049 = vmatpush1.msra.mxu0 %v253
    %1050 = vmatprep.subr.mxu0 %v258
    %1051 = vmatpush1.msra.mxu0 %v257
    %1052 = vmatprep.subr.mxu0 %v262
    %1053 = vmatpush1.msra.mxu0 %v261
    %1054 = vmatprep.subr.mxu0 %v266
    %1055 = vmatpush1.msra.mxu0 %v265
    %1056 = vmatprep.subr.mxu0 %v270
    %1057 = vmatpush1.msra.mxu0 %v269
    %1058 = vmatprep.subr.mxu0 %v274
    %1059 = vmatpush1.msra.mxu0 %v273
    %1060 = vmatprep.subr.mxu0 %v278
    %1061 = vmatpush1.msra.mxu0 %v277
    %1062 = vmatprep.subr.mxu0 %v282
    %1063 = vmatpush1.msra.mxu0 %v281
    %1064 = vmatprep.subr.mxu0 %v286
    %1065 = vmatpush1.msra.mxu0 %v285
    %1066 = vmatprep.subr.mxu0 %v290
    %1067 = vmatpush1.msra.mxu0 %v289
    %1068 = vmatprep.subr.mxu0 %v294
    %1069 = vmatpush1.msra.mxu0 %v293
    %1070 = vmatprep.subr.mxu0 0.0
    %1071 = vmatpush1.msra.mxu0 0.0
    %1072 = vmatprep.subr.mxu0 0.0
    %1073 = vmatpush1.msra.mxu0 0.0
    %1074 = vmatprep.subr.mxu0 0.0
    %1075 = vmatpush1.msra.mxu0 0.0
    %1076 = vmatprep.subr.mxu0 0.0
    %1077 = vmatpush1.msra.mxu0 0.0
    %1078 = vmatprep.subr.mxu0 0.0
    %1079 = vmatpush1.msra.mxu0 0.0
    %1080 = vmatprep.subr.mxu0 0.0
    %1081 = vmatpush1.msra.mxu0 0.0
    %1082 = vmatprep.subr.mxu0 0.0
    %1083 = vmatpush1.msra.mxu0 0.0
    %1084 = vmatprep.subr.mxu0 0.0
    %1085 = vmatpush1.msra.mxu0 0.0
    %1086 = vmatprep.subr.mxu0 0.0
    %1087 = vmatpush1.msra.mxu0 0.0
    %1088 = vmatprep.subr.mxu0 0.0
    %1089 = vmatpush1.msra.mxu0 0.0
    %1090 = vmatprep.subr.mxu0 0.0
    %1091 = vmatpush1.msra.mxu0 0.0
    %1092 = vmatprep.subr.mxu0 0.0
    %1093 = vmatpush1.msra.mxu0 0.0
    %1094 = vmatprep.subr.mxu0 0.0
    %1095 = vmatpush1.msra.mxu0 0.0
    %1096 = vmatprep.subr.mxu0 0.0
    %1097 = vmatpush1.msra.mxu0 0.0
    %1098 = vmatprep.subr.mxu0 0.0
    %1099 = vmatpush1.msra.mxu0 0.0
    %1100 = vmatprep.subr.mxu0 0.0
    %1101 = vmatpush1.msra.mxu0 0.0
    %1102 = vmatprep.mubr.f32.mxu0 0.0
    %1103 = vmatmul.mubr.f32.gmra.mrb[0].mxu0 %v959
    %v1104 = vpop.f32.mrb[0].mxu0
    %v1105 = vadd.f32 0.0, %v1104
    %v1106 = vpop.f32.mrb[0].mxu0
    %v1107 = vadd.f32 0.0, %v1106
    %1108 = vdwg.mxu0
    %v1109 = vadd.f32 %v963, %v1034
    %v1110 = vadd.f32 %v964, %v1036
    %v1111 = vadd.f32 %v965, %v1105
    %v1112 = vadd.f32 %v966, %v1107
    %v1113 = vtanh.pop %v1109
    %v1114 = vtanh.pop %v1110
    %v1115 = vtanh.pop %v1111
    %v1116 = vtanh.pop %v1112
    %v1117 = vmul.f32 %v1113, 0.5
    %v1118 = vmul.f32 %v1114, 0.5
    %v1119 = vmul.f32 %v1115, 0.5
    %v1120 = vadd.f32 %v1117, 0.5
    %v1121 = vadd.f32 %v1118, 0.5
    %v1122 = vadd.f32 %v1119, 0.5
    %v1123 = vmul.f32 %v1121, %v957
    %v1124 = vmul.f32 %v1120, %v1116
    %v1125 = vadd.f32 %v1123, %v1124
    %v1126 = vtanh.pop %v1125
    %v1127 = vmul.f32 %v1122, %v1126
    %s1128 = smul.u32 5, 4
    %s1129 = smul.addr %s1128, 8
    %s1130 = scalar_lea.vmem [#allocation2], %s1129
    %v1131 = vld [vmem:[%s1130] sm:$0xff]
    %v1132 = vld [vmem:[%s1130 + $0x8] sm:$0xff]
    %v1133 = vld [vmem:[%s1130 + $0x10] sm:$0xff]
    %v1134 = vld [vmem:[%s1130 + $0x18] sm:$0xff]
    %1135 = vmatprep.subr.mxu0 %v232
    %1136 = vmatpush1.msra.mxu0 %v231
    %1137 = vmatprep.subr.mxu0 %v236
    %1138 = vmatpush1.msra.mxu0 %v235
    %1139 = vmatprep.subr.mxu0 %v240
    %1140 = vmatpush1.msra.mxu0 %v239
    %1141 = vmatprep.subr.mxu0 %v244
    %1142 = vmatpush1.msra.mxu0 %v243
    %1143 = vmatprep.subr.mxu0 %v248
    %1144 = vmatpush1.msra.mxu0 %v247
    %1145 = vmatprep.subr.mxu0 %v252
    %1146 = vmatpush1.msra.mxu0 %v251
    %1147 = vmatprep.subr.mxu0 %v256
    %1148 = vmatpush1.msra.mxu0 %v255
    %1149 = vmatprep.subr.mxu0 %v260
    %1150 = vmatpush1.msra.mxu0 %v259
    %1151 = vmatprep.subr.mxu0 %v264
    %1152 = vmatpush1.msra.mxu0 %v263
    %1153 = vmatprep.subr.mxu0 %v268
    %1154 = vmatpush1.msra.mxu0 %v267
    %1155 = vmatprep.subr.mxu0 %v272
    %1156 = vmatpush1.msra.mxu0 %v271
    %1157 = vmatprep.subr.mxu0 %v276
    %1158 = vmatpush1.msra.mxu0 %v275
    %1159 = vmatprep.subr.mxu0 %v280
    %1160 = vmatpush1.msra.mxu0 %v279
    %1161 = vmatprep.subr.mxu0 %v284
    %1162 = vmatpush1.msra.mxu0 %v283
    %1163 = vmatprep.subr.mxu0 %v288
    %1164 = vmatpush1.msra.mxu0 %v287
    %1165 = vmatprep.subr.mxu0 %v292
    %1166 = vmatpush1.msra.mxu0 %v291
    %1167 = vmatprep.subr.mxu0 0.0
    %1168 = vmatpush1.msra.mxu0 0.0
    %1169 = vmatprep.subr.mxu0 0.0
    %1170 = vmatpush1.msra.mxu0 0.0
    %1171 = vmatprep.subr.mxu0 0.0
    %1172 = vmatpush1.msra.mxu0 0.0
    %1173 = vmatprep.subr.mxu0 0.0
    %1174 = vmatpush1.msra.mxu0 0.0
    %1175 = vmatprep.subr.mxu0 0.0
    %1176 = vmatpush1.msra.mxu0 0.0
    %1177 = vmatprep.subr.mxu0 0.0
    %1178 = vmatpush1.msra.mxu0 0.0
    %1179 = vmatprep.subr.mxu0 0.0
    %1180 = vmatpush1.msra.mxu0 0.0
    %1181 = vmatprep.subr.mxu0 0.0
    %1182 = vmatpush1.msra.mxu0 0.0
    %1183 = vmatprep.subr.mxu0 0.0
    %1184 = vmatpush1.msra.mxu0 0.0
    %1185 = vmatprep.subr.mxu0 0.0
    %1186 = vmatpush1.msra.mxu0 0.0
    %1187 = vmatprep.subr.mxu0 0.0
    %1188 = vmatpush1.msra.mxu0 0.0
    %1189 = vmatprep.subr.mxu0 0.0
    %1190 = vmatpush1.msra.mxu0 0.0
    %1191 = vmatprep.subr.mxu0 0.0
    %1192 = vmatpush1.msra.mxu0 0.0
    %1193 = vmatprep.subr.mxu0 0.0
    %1194 = vmatpush1.msra.mxu0 0.0
    %1195 = vmatprep.subr.mxu0 0.0
    %1196 = vmatpush1.msra.mxu0 0.0
    %1197 = vmatprep.subr.mxu0 0.0
    %1198 = vmatpush1.msra.mxu0 0.0
    %1199 = vmatprep.mubr.f32.mxu0 0.0
    %1200 = vmatmul.mubr.f32.gmra.mrb[0].mxu0 %v1127
    %v1201 = vpop.f32.mrb[0].mxu0
    %v1202 = vadd.f32 0.0, %v1201
    %v1203 = vpop.f32.mrb[0].mxu0
    %v1204 = vadd.f32 0.0, %v1203
    %1205 = vdwg.mxu0
    %1206 = vmatprep.subr.mxu0 %v234
    %1207 = vmatpush1.msra.mxu0 %v233
    %1208 = vmatprep.subr.mxu0 %v238
    %1209 = vmatpush1.msra.mxu0 %v237
    %1210 = vmatprep.subr.mxu0 %v242
    %1211 = vmatpush1.msra.mxu0 %v241
    %1212 = vmatprep.subr.mxu0 %v246
    %1213 = vmatpush1.msra.mxu0 %v245
    %1214 = vmatprep.subr.mxu0 %v250
    %1215 = vmatpush1.msra.mxu0 %v249
    %1216 = vmatprep.subr.mxu0 %v254
    %1217 = vmatpush1.msra.mxu0 %v253
    %1218 = vmatprep.subr.mxu0 %v258
    %1219 = vmatpush1.msra.mxu0 %v257
    %1220 = vmatprep.subr.mxu0 %v262
    %1221 = vmatpush1.msra.mxu0 %v261
    %1222 = vmatprep.subr.mxu0 %v266
    %1223 = vmatpush1.msra.mxu0 %v265
    %1224 = vmatprep.subr.mxu0 %v270
    %1225 = vmatpush1.msra.mxu0 %v269
    %1226 = vmatprep.subr.mxu0 %v274
    %1227 = vmatpush1.msra.mxu0 %v273
    %1228 = vmatprep.subr.mxu0 %v278
    %1229 = vmatpush1.msra.mxu0 %v277
    %1230 = vmatprep.subr.mxu0 %v282
    %1231 = vmatpush1.msra.mxu0 %v281
    %1232 = vmatprep.subr.mxu0 %v286
    %1233 = vmatpush1.msra.mxu0 %v285
    %1234 = vmatprep.subr.mxu0 %v290
    %1235 = vmatpush1.msra.mxu0 %v289
    %1236 = vmatprep.subr.mxu0 %v294
    %1237 = vmatpush1.msra.mxu0 %v293
    %1238 = vmatprep.subr.mxu0 0.0
    %1239 = vmatpush1.msra.mxu0 0.0
    %1240 = vmatprep.subr.mxu0 0.0
    %1241 = vmatpush1.msra.mxu0 0.0
    %1242 = vmatprep.subr.mxu0 0.0
    %1243 = vmatpush1.msra.mxu0 0.0
    %1244 = vmatprep.subr.mxu0 0.0
    %1245 = vmatpush1.msra.mxu0 0.0
    %1246 = vmatprep.subr.mxu0 0.0
    %1247 = vmatpush1.msra.mxu0 0.0
    %1248 = vmatprep.subr.mxu0 0.0
    %1249 = vmatpush1.msra.mxu0 0.0
    %1250 = vmatprep.subr.mxu0 0.0
    %1251 = vmatpush1.msra.mxu0 0.0
    %1252 = vmatprep.subr.mxu0 0.0
    %1253 = vmatpush1.msra.mxu0 0.0
    %1254 = vmatprep.subr.mxu0 0.0
    %1255 = vmatpush1.msra.mxu0 0.0
    %1256 = vmatprep.subr.mxu0 0.0
    %1257 = vmatpush1.msra.mxu0 0.0
    %1258 = vmatprep.subr.mxu0 0.0
    %1259 = vmatpush1.msra.mxu0 0.0
    %1260 = vmatprep.subr.mxu0 0.0
    %1261 = vmatpush1.msra.mxu0 0.0
    %1262 = vmatprep.subr.mxu0 0.0
    %1263 = vmatpush1.msra.mxu0 0.0
    %1264 = vmatprep.subr.mxu0 0.0
    %1265 = vmatpush1.msra.mxu0 0.0
    %1266 = vmatprep.subr.mxu0 0.0
    %1267 = vmatpush1.msra.mxu0 0.0
    %1268 = vmatprep.subr.mxu0 0.0
    %1269 = vmatpush1.msra.mxu0 0.0
    %1270 = vmatprep.mubr.f32.mxu0 0.0
    %1271 = vmatmul.mubr.f32.gmra.mrb[0].mxu0 %v1127
    %v1272 = vpop.f32.mrb[0].mxu0
    %v1273 = vadd.f32 0.0, %v1272
    %v1274 = vpop.f32.mrb[0].mxu0
    %v1275 = vadd.f32 0.0, %v1274
    %1276 = vdwg.mxu0
    %v1277 = vadd.f32 %v1131, %v1202
    %v1278 = vadd.f32 %v1132, %v1204
    %v1279 = vadd.f32 %v1133, %v1273
    %v1280 = vadd.f32 %v1134, %v1275
    %v1281 = vtanh.pop %v1277
    %v1282 = vtanh.pop %v1278
    %v1283 = vtanh.pop %v1279
    %v1284 = vtanh.pop %v1280
    %v1285 = vmul.f32 %v1281, 0.5
    %v1286 = vmul.f32 %v1282, 0.5
    %v1287 = vmul.f32 %v1283, 0.5
    %v1288 = vadd.f32 %v1285, 0.5
    %v1289 = vadd.f32 %v1286, 0.5
    %v1290 = vadd.f32 %v1287, 0.5
    %v1291 = vmul.f32 %v1289, %v1125
    %v1292 = vmul.f32 %v1288, %v1284
    %v1293 = vadd.f32 %v1291, %v1292
    %v1294 = vtanh.pop %v1293
    %v1295 = vmul.f32 %v1290, %v1294
    %s1296 = smul.u32 6, 4
    %s1297 = smul.addr %s1296, 8
    %s1298 = scalar_lea.vmem [#allocation2], %s1297
    %v1299 = vld [vmem:[%s1298] sm:$0xff]
    %v1300 = vld [vmem:[%s1298 + $0x8] sm:$0xff]
    %v1301 = vld [vmem:[%s1298 + $0x10] sm:$0xff]
    %v1302 = vld [vmem:[%s1298 + $0x18] sm:$0xff]
    %1303 = vmatprep.subr.mxu0 %v232
    %1304 = vmatpush1.msra.mxu0 %v231
    %1305 = vmatprep.subr.mxu0 %v236
    %1306 = vmatpush1.msra.mxu0 %v235
    %1307 = vmatprep.subr.mxu0 %v240
    %1308 = vmatpush1.msra.mxu0 %v239
    %1309 = vmatprep.subr.mxu0 %v244
    %1310 = vmatpush1.msra.mxu0 %v243
    %1311 = vmatprep.subr.mxu0 %v248
    %1312 = vmatpush1.msra.mxu0 %v247
    %1313 = vmatprep.subr.mxu0 %v252
    %1314 = vmatpush1.msra.mxu0 %v251
    %1315 = vmatprep.subr.mxu0 %v256
    %1316 = vmatpush1.msra.mxu0 %v255
    %1317 = vmatprep.subr.mxu0 %v260
    %1318 = vmatpush1.msra.mxu0 %v259
    %1319 = vmatprep.subr.mxu0 %v264
    %1320 = vmatpush1.msra.mxu0 %v263
    %1321 = vmatprep.subr.mxu0 %v268
    %1322 = vmatpush1.msra.mxu0 %v267
    %1323 = vmatprep.subr.mxu0 %v272
    %1324 = vmatpush1.msra.mxu0 %v271
    %1325 = vmatprep.subr.mxu0 %v276
    %1326 = vmatpush1.msra.mxu0 %v275
    %1327 = vmatprep.subr.mxu0 %v280
    %1328 = vmatpush1.msra.mxu0 %v279
    %1329 = vmatprep.subr.mxu0 %v284
    %1330 = vmatpush1.msra.mxu0 %v283
    %1331 = vmatprep.subr.mxu0 %v288
    %1332 = vmatpush1.msra.mxu0 %v287
    %1333 = vmatprep.subr.mxu0 %v292
    %1334 = vmatpush1.msra.mxu0 %v291
    %1335 = vmatprep.subr.mxu0 0.0
    %1336 = vmatpush1.msra.mxu0 0.0
    %1337 = vmatprep.subr.mxu0 0.0
    %1338 = vmatpush1.msra.mxu0 0.0
    %1339 = vmatprep.subr.mxu0 0.0
    %1340 = vmatpush1.msra.mxu0 0.0
    %1341 = vmatprep.subr.mxu0 0.0
    %1342 = vmatpush1.msra.mxu0 0.0
    %1343 = vmatprep.subr.mxu0 0.0
    %1344 = vmatpush1.msra.mxu0 0.0
    %1345 = vmatprep.subr.mxu0 0.0
    %1346 = vmatpush1.msra.mxu0 0.0
    %1347 = vmatprep.subr.mxu0 0.0
    %1348 = vmatpush1.msra.mxu0 0.0
    %1349 = vmatprep.subr.mxu0 0.0
    %1350 = vmatpush1.msra.mxu0 0.0
    %1351 = vmatprep.subr.mxu0 0.0
    %1352 = vmatpush1.msra.mxu0 0.0
    %1353 = vmatprep.subr.mxu0 0.0
    %1354 = vmatpush1.msra.mxu0 0.0
    %1355 = vmatprep.subr.mxu0 0.0
    %1356 = vmatpush1.msra.mxu0 0.0
    %1357 = vmatprep.subr.mxu0 0.0
    %1358 = vmatpush1.msra.mxu0 0.0
    %1359 = vmatprep.subr.mxu0 0.0
    %1360 = vmatpush1.msra.mxu0 0.0
    %1361 = vmatprep.subr.mxu0 0.0
    %1362 = vmatpush1.msra.mxu0 0.0
    %1363 = vmatprep.subr.mxu0 0.0
    %1364 = vmatpush1.msra.mxu0 0.0
    %1365 = vmatprep.subr.mxu0 0.0
    %1366 = vmatpush1.msra.mxu0 0.0
    %1367 = vmatprep.mubr.f32.mxu0 0.0
    %1368 = vmatmul.mubr.f32.gmra.mrb[0].mxu0 %v1295
    %v1369 = vpop.f32.mrb[0].mxu0
    %v1370 = vadd.f32 0.0, %v1369
    %v1371 = vpop.f32.mrb[0].mxu0
    %v1372 = vadd.f32 0.0, %v1371
    %1373 = vdwg.mxu0
    %1374 = vmatprep.subr.mxu0 %v234
    %1375 = vmatpush1.msra.mxu0 %v233
    %1376 = vmatprep.subr.mxu0 %v238
    %1377 = vmatpush1.msra.mxu0 %v237
    %1378 = vmatprep.subr.mxu0 %v242
    %1379 = vmatpush1.msra.mxu0 %v241
    %1380 = vmatprep.subr.mxu0 %v246
    %1381 = vmatpush1.msra.mxu0 %v245
    %1382 = vmatprep.subr.mxu0 %v250
    %1383 = vmatpush1.msra.mxu0 %v249
    %1384 = vmatprep.subr.mxu0 %v254
    %1385 = vmatpush1.msra.mxu0 %v253
    %1386 = vmatprep.subr.mxu0 %v258
    %1387 = vmatpush1.msra.mxu0 %v257
    %1388 = vmatprep.subr.mxu0 %v262
    %1389 = vmatpush1.msra.mxu0 %v261
    %1390 = vmatprep.subr.mxu0 %v266
    %1391 = vmatpush1.msra.mxu0 %v265
    %1392 = vmatprep.subr.mxu0 %v270
    %1393 = vmatpush1.msra.mxu0 %v269
    %1394 = vmatprep.subr.mxu0 %v274
    %1395 = vmatpush1.msra.mxu0 %v273
    %1396 = vmatprep.subr.mxu0 %v278
    %1397 = vmatpush1.msra.mxu0 %v277
    %1398 = vmatprep.subr.mxu0 %v282
    %1399 = vmatpush1.msra.mxu0 %v281
    %1400 = vmatprep.subr.mxu0 %v286
    %1401 = vmatpush1.msra.mxu0 %v285
    %1402 = vmatprep.subr.mxu0 %v290
    %1403 = vmatpush1.msra.mxu0 %v289
    %1404 = vmatprep.subr.mxu0 %v294
    %1405 = vmatpush1.msra.mxu0 %v293
    %1406 = vmatprep.subr.mxu0 0.0
    %1407 = vmatpush1.msra.mxu0 0.0
    %1408 = vmatprep.subr.mxu0 0.0
    %1409 = vmatpush1.msra.mxu0 0.0
    %1410 = vmatprep.subr.mxu0 0.0
    %1411 = vmatpush1.msra.mxu0 0.0
    %1412 = vmatprep.subr.mxu0 0.0
    %1413 = vmatpush1.msra.mxu0 0.0
    %1414 = vmatprep.subr.mxu0 0.0
    %1415 = vmatpush1.msra.mxu0 0.0
    %1416 = vmatprep.subr.mxu0 0.0
    %1417 = vmatpush1.msra.mxu0 0.0
    %1418 = vmatprep.subr.mxu0 0.0
    %1419 = vmatpush1.msra.mxu0 0.0
    %1420 = vmatprep.subr.mxu0 0.0
    %1421 = vmatpush1.msra.mxu0 0.0
    %1422 = vmatprep.subr.mxu0 0.0
    %1423 = vmatpush1.msra.mxu0 0.0
    %1424 = vmatprep.subr.mxu0 0.0
    %1425 = vmatpush1.msra.mxu0 0.0
    %1426 = vmatprep.subr.mxu0 0.0
    %1427 = vmatpush1.msra.mxu0 0.0
    %1428 = vmatprep.subr.mxu0 0.0
    %1429 = vmatpush1.msra.mxu0 0.0
    %1430 = vmatprep.subr.mxu0 0.0
    %1431 = vmatpush1.msra.mxu0 0.0
    %1432 = vmatprep.subr.mxu0 0.0
    %1433 = vmatpush1.msra.mxu0 0.0
    %1434 = vmatprep.subr.mxu0 0.0
    %1435 = vmatpush1.msra.mxu0 0.0
    %1436 = vmatprep.subr.mxu0 0.0
    %1437 = vmatpush1.msra.mxu0 0.0
    %1438 = vmatprep.mubr.f32.mxu0 0.0
    %1439 = vmatmul.mubr.f32.gmra.mrb[0].mxu0 %v1295
    %v1440 = vpop.f32.mrb[0].mxu0
    %v1441 = vadd.f32 0.0, %v1440
    %v1442 = vpop.f32.mrb[0].mxu0
    %v1443 = vadd.f32 0.0, %v1442
    %1444 = vdwg.mxu0
    %v1445 = vadd.f32 %v1299, %v1370
    %v1446 = vadd.f32 %v1300, %v1372
    %v1447 = vadd.f32 %v1301, %v1441
    %v1448 = vadd.f32 %v1302, %v1443
    %v1449 = vtanh.pop %v1445
    %v1450 = vtanh.pop %v1446
    %v1451 = vtanh.pop %v1447
    %v1452 = vtanh.pop %v1448
    %v1453 = vmul.f32 %v1449, 0.5
    %v1454 = vmul.f32 %v1450, 0.5
    %v1455 = vmul.f32 %v1451, 0.5
    %v1456 = vadd.f32 %v1453, 0.5
    %v1457 = vadd.f32 %v1454, 0.5
    %v1458 = vadd.f32 %v1455, 0.5
    %v1459 = vmul.f32 %v1457, %v1293
    %v1460 = vmul.f32 %v1456, %v1452
    %v1461 = vadd.f32 %v1459, %v1460
    %v1462 = vtanh.pop %v1461
    %v1463 = vmul.f32 %v1458, %v1462
    %s1464 = smul.u32 7, 4
    %s1465 = smul.addr %s1464, 8
    %s1466 = scalar_lea.vmem [#allocation2], %s1465
    %v1467 = vld [vmem:[%s1466] sm:$0xff]
    %v1468 = vld [vmem:[%s1466 + $0x8] sm:$0xff]
    %v1469 = vld [vmem:[%s1466 + $0x10] sm:$0xff]
    %v1470 = vld [vmem:[%s1466 + $0x18] sm:$0xff]
    %1471 = vmatprep.subr.mxu0 %v232
    %1472 = vmatpush1.msra.mxu0 %v231
    %1473 = vmatprep.subr.mxu0 %v236
    %1474 = vmatpush1.msra.mxu0 %v235
    %1475 = vmatprep.subr.mxu0 %v240
    %1476 = vmatpush1.msra.mxu0 %v239
    %1477 = vmatprep.subr.mxu0 %v244
    %1478 = vmatpush1.msra.mxu0 %v243
    %1479 = vmatprep.subr.mxu0 %v248
    %1480 = vmatpush1.msra.mxu0 %v247
    %1481 = vmatprep.subr.mxu0 %v252
    %1482 = vmatpush1.msra.mxu0 %v251
    %1483 = vmatprep.subr.mxu0 %v256
    %1484 = vmatpush1.msra.mxu0 %v255
    %1485 = vmatprep.subr.mxu0 %v260
    %1486 = vmatpush1.msra.mxu0 %v259
    %1487 = vmatprep.subr.mxu0 %v264
    %1488 = vmatpush1.msra.mxu0 %v263
    %1489 = vmatprep.subr.mxu0 %v268
    %1490 = vmatpush1.msra.mxu0 %v267
    %1491 = vmatprep.subr.mxu0 %v272
    %1492 = vmatpush1.msra.mxu0 %v271
    %1493 = vmatprep.subr.mxu0 %v276
    %1494 = vmatpush1.msra.mxu0 %v275
    %1495 = vmatprep.subr.mxu0 %v280
    %1496 = vmatpush1.msra.mxu0 %v279
    %1497 = vmatprep.subr.mxu0 %v284
    %1498 = vmatpush1.msra.mxu0 %v283
    %1499 = vmatprep.subr.mxu0 %v288
    %1500 = vmatpush1.msra.mxu0 %v287
    %1501 = vmatprep.subr.mxu0 %v292
    %1502 = vmatpush1.msra.mxu0 %v291
    %1503 = vmatprep.subr.mxu0 0.0
    %1504 = vmatpush1.msra.mxu0 0.0
    %1505 = vmatprep.subr.mxu0 0.0
    %1506 = vmatpush1.msra.mxu0 0.0
    %1507 = vmatprep.subr.mxu0 0.0
    %1508 = vmatpush1.msra.mxu0 0.0
    %1509 = vmatprep.subr.mxu0 0.0
    %1510 = vmatpush1.msra.mxu0 0.0
    %1511 = vmatprep.subr.mxu0 0.0
    %1512 = vmatpush1.msra.mxu0 0.0
    %1513 = vmatprep.subr.mxu0 0.0
    %1514 = vmatpush1.msra.mxu0 0.0
    %1515 = vmatprep.subr.mxu0 0.0
    %1516 = vmatpush1.msra.mxu0 0.0
    %1517 = vmatprep.subr.mxu0 0.0
    %1518 = vmatpush1.msra.mxu0 0.0
    %1519 = vmatprep.subr.mxu0 0.0
    %1520 = vmatpush1.msra.mxu0 0.0
    %1521 = vmatprep.subr.mxu0 0.0
    %1522 = vmatpush1.msra.mxu0 0.0
    %1523 = vmatprep.subr.mxu0 0.0
    %1524 = vmatpush1.msra.mxu0 0.0
    %1525 = vmatprep.subr.mxu0 0.0
    %1526 = vmatpush1.msra.mxu0 0.0
    %1527 = vmatprep.subr.mxu0 0.0
    %1528 = vmatpush1.msra.mxu0 0.0
    %1529 = vmatprep.subr.mxu0 0.0
    %1530 = vmatpush1.msra.mxu0 0.0
    %1531 = vmatprep.subr.mxu0 0.0
    %1532 = vmatpush1.msra.mxu0 0.0
    %1533 = vmatprep.subr.mxu0 0.0
    %1534 = vmatpush1.msra.mxu0 0.0
    %1535 = vmatprep.mubr.f32.mxu0 0.0
    %1536 = vmatmul.mubr.f32.gmra.mrb[0].mxu0 %v1463
    %v1537 = vpop.f32.mrb[0].mxu0
    %v1538 = vadd.f32 0.0, %v1537
    %v1539 = vpop.f32.mrb[0].mxu0
    %v1540 = vadd.f32 0.0, %v1539
    %1541 = vdwg.mxu0
    %1542 = vmatprep.subr.mxu0 %v234
    %1543 = vmatpush1.msra.mxu0 %v233
    %1544 = vmatprep.subr.mxu0 %v238
    %1545 = vmatpush1.msra.mxu0 %v237
    %1546 = vmatprep.subr.mxu0 %v242
    %1547 = vmatpush1.msra.mxu0 %v241
    %1548 = vmatprep.subr.mxu0 %v246
    %1549 = vmatpush1.msra.mxu0 %v245
    %1550 = vmatprep.subr.mxu0 %v250
    %1551 = vmatpush1.msra.mxu0 %v249
    %1552 = vmatprep.subr.mxu0 %v254
    %1553 = vmatpush1.msra.mxu0 %v253
    %1554 = vmatprep.subr.mxu0 %v258
    %1555 = vmatpush1.msra.mxu0 %v257
    %1556 = vmatprep.subr.mxu0 %v262
    %1557 = vmatpush1.msra.mxu0 %v261
    %1558 = vmatprep.subr.mxu0 %v266
    %1559 = vmatpush1.msra.mxu0 %v265
    %1560 = vmatprep.subr.mxu0 %v270
    %1561 = vmatpush1.msra.mxu0 %v269
    %1562 = vmatprep.subr.mxu0 %v274
    %1563 = vmatpush1.msra.mxu0 %v273
    %1564 = vmatprep.subr.mxu0 %v278
    %1565 = vmatpush1.msra.mxu0 %v277
    %1566 = vmatprep.subr.mxu0 %v282
    %1567 = vmatpush1.msra.mxu0 %v281
    %1568 = vmatprep.subr.mxu0 %v286
    %1569 = vmatpush1.msra.mxu0 %v285
    %1570 = vmatprep.subr.mxu0 %v290
    %1571 = vmatpush1.msra.mxu0 %v289
    %1572 = vmatprep.subr.mxu0 %v294
    %1573 = vmatpush1.msra.mxu0 %v293
    %1574 = vmatprep.subr.mxu0 0.0
    %1575 = vmatpush1.msra.mxu0 0.0
    %1576 = vmatprep.subr.mxu0 0.0
    %1577 = vmatpush1.msra.mxu0 0.0
    %1578 = vmatprep.subr.mxu0 0.0
    %1579 = vmatpush1.msra.mxu0 0.0
    %1580 = vmatprep.subr.mxu0 0.0
    %1581 = vmatpush1.msra.mxu0 0.0
    %1582 = vmatprep.subr.mxu0 0.0
    %1583 = vmatpush1.msra.mxu0 0.0
    %1584 = vmatprep.subr.mxu0 0.0
    %1585 = vmatpush1.msra.mxu0 0.0
    %1586 = vmatprep.subr.mxu0 0.0
    %1587 = vmatpush1.msra.mxu0 0.0
    %1588 = vmatprep.subr.mxu0 0.0
    %1589 = vmatpush1.msra.mxu0 0.0
    %1590 = vmatprep.subr.mxu0 0.0
    %1591 = vmatpush1.msra.mxu0 0.0
    %1592 = vmatprep.subr.mxu0 0.0
    %1593 = vmatpush1.msra.mxu0 0.0
    %1594 = vmatprep.subr.mxu0 0.0
    %1595 = vmatpush1.msra.mxu0 0.0
    %1596 = vmatprep.subr.mxu0 0.0
    %1597 = vmatpush1.msra.mxu0 0.0
    %1598 = vmatprep.subr.mxu0 0.0
    %1599 = vmatpush1.msra.mxu0 0.0
    %1600 = vmatprep.subr.mxu0 0.0
    %1601 = vmatpush1.msra.mxu0 0.0
    %1602 = vmatprep.subr.mxu0 0.0
    %1603 = vmatpush1.msra.mxu0 0.0
    %1604 = vmatprep.subr.mxu0 0.0
    %1605 = vmatpush1.msra.mxu0 0.0
    %1606 = vmatprep.mubr.f32.mxu0 0.0
    %1607 = vmatmul.mubr.f32.gmra.mrb[0].mxu0 %v1463
    %v1608 = vpop.f32.mrb[0].mxu0
    %v1609 = vadd.f32 0.0, %v1608
    %v1610 = vpop.f32.mrb[0].mxu0
    %v1611 = vadd.f32 0.0, %v1610
    %1612 = vdwg.mxu0
    %v1613 = vadd.f32 %v1467, %v1538
    %v1614 = vadd.f32 %v1468, %v1540
    %v1615 = vadd.f32 %v1469, %v1609
    %v1616 = vadd.f32 %v1470, %v1611
    %v1617 = vtanh.pop %v1613
    %v1618 = vtanh.pop %v1614
    %v1619 = vtanh.pop %v1615
    %v1620 = vtanh.pop %v1616
    %v1621 = vmul.f32 %v1617, 0.5
    %v1622 = vmul.f32 %v1618, 0.5
    %v1623 = vmul.f32 %v1619, 0.5
    %v1624 = vadd.f32 %v1621, 0.5
    %v1625 = vadd.f32 %v1622, 0.5
    %v1626 = vadd.f32 %v1623, 0.5
    %v1627 = vmul.f32 %v1625, %v1461
    %v1628 = vmul.f32 %v1624, %v1620
    %v1629 = vadd.f32 %v1627, %v1628
    %v1630 = vtanh.pop %v1629
    %v1631 = vmul.f32 %v1626, %v1630
    %1632 = vst [vmem:[#allocation3] sm:$0xff] %v1631
    %1633 = vst [vmem:[#allocation5] sm:$0xff] %v1629
    %v1634 = vld [vmem:[%s6] sm:$0xff]
    %v1635 = vld [vmem:[%s6 + $0x8] sm:$0xff]
    %v1636 = vld [vmem:[%s6 + $0x10] sm:$0xff]
    %v1637 = vld [vmem:[%s6 + $0x18] sm:$0xff]
    %v1638 = vld [vmem:[%s6 + $0x20] sm:$0xff]
    %v1639 = vld [vmem:[%s6 + $0x28] sm:$0xff]
    %v1640 = vld [vmem:[%s6 + $0x30] sm:$0xff]
    %v1641 = vld [vmem:[%s6 + $0x38] sm:$0xff]
    %v1642 = vld [vmem:[%s6 + $0x40] sm:$0xff]
    %v1643 = vld [vmem:[%s6 + $0x48] sm:$0xff]
    %v1644 = vld [vmem:[%s6 + $0x50] sm:$0xff]
    %v1645 = vld [vmem:[%s6 + $0x58] sm:$0xff]
    %v1646 = vld [vmem:[%s6 + $0x60] sm:$0xff]
    %v1647 = vld [vmem:[%s6 + $0x68] sm:$0xff]
    %v1648 = vld [vmem:[%s6 + $0x70] sm:$0xff]
    %v1649 = vld [vmem:[%s6 + $0x78] sm:$0xff]
    %v1650 = vld [vmem:[%s7] sm:$0x1]
    %v1652 = vlaneseq
    %v1653 = vshrl.u32 %v1652, 7
    %v1654 = vsub.s32 0, %v1653
    %v1655 = vrot.slane %v1650, %v1654
    %1657 = vmatprep.subr.mxu0 0.0
    %1658 = vmatpush1.msra.mxu0 %v1634
    %1659 = vmatprep.subr.mxu0 0.0
    %1660 = vmatpush1.msra.mxu0 %v1635
    %1661 = vmatprep.subr.mxu0 0.0
    %1662 = vmatpush1.msra.mxu0 %v1636
    %1663 = vmatprep.subr.mxu0 0.0
    %1664 = vmatpush1.msra.mxu0 %v1637
    %1665 = vmatprep.subr.mxu0 0.0
    %1666 = vmatpush1.msra.mxu0 %v1638
    %1667 = vmatprep.subr.mxu0 0.0
    %1668 = vmatpush1.msra.mxu0 %v1639
    %1669 = vmatprep.subr.mxu0 0.0
    %1670 = vmatpush1.msra.mxu0 %v1640
    %1671 = vmatprep.subr.mxu0 0.0
    %1672 = vmatpush1.msra.mxu0 %v1641
    %1673 = vmatprep.subr.mxu0 0.0
    %1674 = vmatpush1.msra.mxu0 %v1642
    %1675 = vmatprep.subr.mxu0 0.0
    %1676 = vmatpush1.msra.mxu0 %v1643
    %1677 = vmatprep.subr.mxu0 0.0
    %1678 = vmatpush1.msra.mxu0 %v1644
    %1679 = vmatprep.subr.mxu0 0.0
    %1680 = vmatpush1.msra.mxu0 %v1645
    %1681 = vmatprep.subr.mxu0 0.0
    %1682 = vmatpush1.msra.mxu0 %v1646
    %1683 = vmatprep.subr.mxu0 0.0
    %1684 = vmatpush1.msra.mxu0 %v1647
    %1685 = vmatprep.subr.mxu0 0.0
    %1686 = vmatpush1.msra.mxu0 %v1648
    %1687 = vmatprep.subr.mxu0 0.0
    %1688 = vmatpush1.msra.mxu0 %v1649
    %1689 = vmatprep.subr.mxu0 0.0
    %1690 = vmatpush1.msra.mxu0 0.0
    %1691 = vmatprep.subr.mxu0 0.0
    %1692 = vmatpush1.msra.mxu0 0.0
    %1693 = vmatprep.subr.mxu0 0.0
    %1694 = vmatpush1.msra.mxu0 0.0
    %1695 = vmatprep.subr.mxu0 0.0
    %1696 = vmatpush1.msra.mxu0 0.0
    %1697 = vmatprep.subr.mxu0 0.0
    %1698 = vmatpush1.msra.mxu0 0.0
    %1699 = vmatprep.subr.mxu0 0.0
    %1700 = vmatpush1.msra.mxu0 0.0
    %1701 = vmatprep.subr.mxu0 0.0
    %1702 = vmatpush1.msra.mxu0 0.0
    %1703 = vmatprep.subr.mxu0 0.0
    %1704 = vmatpush1.msra.mxu0 0.0
    %1705 = vmatprep.subr.mxu0 0.0
    %1706 = vmatpush1.msra.mxu0 0.0
    %1707 = vmatprep.subr.mxu0 0.0
    %1708 = vmatpush1.msra.mxu0 0.0
    %1709 = vmatprep.subr.mxu0 0.0
    %1710 = vmatpush1.msra.mxu0 0.0
    %1711 = vmatprep.subr.mxu0 0.0
    %1712 = vmatpush1.msra.mxu0 0.0
    %1713 = vmatprep.subr.mxu0 0.0
    %1714 = vmatpush1.msra.mxu0 0.0
    %1715 = vmatprep.subr.mxu0 0.0
    %1716 = vmatpush1.msra.mxu0 0.0
    %1717 = vmatprep.subr.mxu0 0.0
    %1718 = vmatpush1.msra.mxu0 0.0
    %1719 = vmatprep.subr.mxu0 0.0
    %1720 = vmatpush1.msra.mxu0 0.0
    %1721 = vmatprep.mubr.f32.mxu0 0.0
    %1722 = vmatmul.mubr.f32.gmra.mrb[0].mxu0 %v1631
    %v1723 = vpop.f32.mrb[0].mxu0
    %v1724 = vadd.f32 %v1655, %v1723
    %v1725 = vpop.f32.mrb[0].mxu0
    %1726 = vdwg.mxu0
    %1727 = vst [vmem:[%s8] sm:$0xff] %v1724
    // Predicated region
    $region34: #{lstm_model_forward.1} parent=1 // pred_check
      _
    $region35: #{lstm_model_forward.1} parent=1 // pred_check_branch
      %1729 = sbr.rel (0) target = $region37
    $region36: #{lstm_model_forward.1} parent=1 // pred_region
      _
    $region37: #{lstm_model_forward.1} parent=1 // pred_fallthru
      _
    // Predicated region
    $region38: #{lstm_model_forward.1} parent=1 // pred_check
      _
    $region39: #{lstm_model_forward.1} parent=1 // pred_check_branch
      %1731 = sbr.rel (0) target = $region41
    $region40: #{lstm_model_forward.1} parent=1 // pred_region
      %s1733 = ssub.s32 128, 128
      %1734 = vsyncadd [#allocation4], %s1733
      %s1736 = sshll.u32 [#allocation3], 4
      %s1737 = int_to_ptr.vmem [resolvable:$true] %s1736
      %1739 = dma.vmem_to_hbm [thread:$0]  %s1737, 128, %s9, [#allocation4]
    $region41: #{lstm_model_forward.1} parent=1 // pred_fallthru
      _
    // Predicated region
    $region42: #{lstm_model_forward.1} parent=1 // pred_check
      _
    $region43: #{lstm_model_forward.1} parent=1 // pred_check_branch
      %1741 = sbr.rel (0) target = $region45
    $region44: #{lstm_model_forward.1} parent=1 // pred_region
      %s1743 = ssub.s32 128, 128
      %1744 = vsyncadd [#allocation6], %s1743
      %s1746 = sshll.u32 [#allocation5], 4
      %s1747 = int_to_ptr.vmem [resolvable:$true] %s1746
      %1749 = dma.vmem_to_hbm [thread:$0]  %s1747, 128, %s10, [#allocation6]
    $region45: #{lstm_model_forward.1} parent=1 // pred_fallthru
      _
    // Predicated region
    $region46: #{lstm_model_forward.1} parent=1 // pred_check
      _
    $region47: #{lstm_model_forward.1} parent=1 // pred_check_branch
      %1751 = sbr.rel (0) target = $region49
    $region48: #{lstm_model_forward.1} parent=1 // pred_region
      _
    $region49: #{lstm_model_forward.1} parent=1 // pred_fallthru
      _
    // Predicated region
    $region50: #{lstm_model_forward.1} parent=1 // pred_check
      _
    $region51: #{lstm_model_forward.1} parent=1 // pred_check_branch
      %1753 = sbr.rel (0) target = $region53
    $region52: #{lstm_model_forward.1} parent=1 // pred_region
      %1754 = dma.done [#allocation4], 128
    $region53: #{lstm_model_forward.1} parent=1 // pred_fallthru
      _
    // Predicated region
    $region54: #{lstm_model_forward.1} parent=1 // pred_check
      _
    $region55: #{lstm_model_forward.1} parent=1 // pred_check_branch
      %1756 = sbr.rel (0) target = $region57
    $region56: #{lstm_model_forward.1} parent=1 // pred_region
      %1757 = dma.done [#allocation6], 128
    $region57: #{lstm_model_forward.1} parent=1 // pred_fallthru
      _
    %1758 = vsyncpa [#allocation4], 1
    %1759 = vsyncpa [#allocation6], 1

</llo_original>
